<compile_context>
chip_gen: v7x
topology: tpu7x:2x2x1
jax: 0.10.0
libtpu: 0.0.40
codegen_flags: <defaults>
</compile_context>

<pallas_src>
import functools

import jax
import jax.numpy as jnp
import numpy as np
from jax import lax
from jax.experimental import pallas as pl
from jax.experimental.pallas import tpu as pltpu

EPS = 1e-5


def _bn_fold(gamma, beta, mean, var):
    """BatchNorm (eval mode) as y = x*scale + shift, per channel."""
    scale = gamma / jnp.sqrt(var + EPS)
    shift = beta - mean * scale
    return scale, shift


# ---------------------------------------------------------------------------
# Pallas kernel: im2col into VMEM scratch + ONE fused matmul + bias + PReLU
# ---------------------------------------------------------------------------
def basic_block_kernel(x_ref, w_ref, cb_ref, o_ref, patch_ref,
                       *, K, stride, Ho, Wo, Nb):
    """x_ref:     (Nb, Hp, Wp, Cin)  bf16  padded NHWC images for this step
       w_ref:     (Cout, K*K*Cin)    bf16  fused, BN-folded weight
       cb_ref:    (Cout, 2)          f32   col 0 = fused bias, col 1 = alpha
       o_ref:     (Nb, Cout, Ho*Wo)  f32   lane-dense output (NCHW after reshape)
       patch_ref: (Ho*Wo, K*K*Cin)   f32   im2col VMEM scratch"""
    Cin = x_ref.shape[-1]
    M = Ho * Wo

    # Per-step constants, hoisted out of the image loop.
    w = w_ref[...]                            # (Cout, K*K*Cin) bf16
    bias = cb_ref[:, 0:1]                     # (Cout, 1) f32
    alpha = cb_ref[:, 1:2]                    # (Cout, 1) f32

    for b in range(Nb):
        # One upcast per image; all unaligned tap slicing happens on 32-bit
        # layouts, and the assembled patch is downcast once for the MXU.
        x = x_ref[b].astype(jnp.float32)                          # (Hp, Wp, Cin)
        for kh in range(K):
            for kw in range(K):
                t = kh * K + kw
                sl = x[kh:kh + stride * (Ho - 1) + 1:stride,
                       kw:kw + stride * (Wo - 1) + 1:stride, :]   # (Ho, Wo, Cin)
                patch_ref[:, t * Cin:(t + 1) * Cin] = sl.reshape(M, Cin)
        patch = patch_ref[...].astype(jnp.bfloat16)               # (M, K*K*Cin)

        # Single fused conv: (Cout, KKC) x (M, KKC)^T -> (Cout, M), f32 acc.
        acc = lax.dot_general(w, patch,
                              dimension_numbers=(((1,), (1,)), ((), ())),
                              preferred_element_type=jnp.float32)
        y = acc + bias
        o_ref[b] = jnp.where(y > 0, y, alpha * y).astype(o_ref.dtype)


# ---------------------------------------------------------------------------
# Wrapper: ACB-branch + BatchNorm folding and the pallas_call
# ---------------------------------------------------------------------------
def basic_block_forward(x_nchw, params, *, K, stride, pad, out_dtype=jnp.float32):
    N, Cin, H, W = x_nchw.shape
    Cout = params["w_sq"].shape[0]
    # The asymmetric-branch embedding identity needs odd K and pad >= K//2.
    assert K % 2 == 1 and pad >= K // 2, "requires odd K and pad >= K//2"
    Ho = (H + 2 * pad - K) // stride + 1
    Wo = (W + 2 * pad - K) // stride + 1
    M = Ho * Wo
    Hp, Wp = H + 2 * pad, W + 2 * pad

    # Images per grid step: biggest of {4, 2, 1} that divides N while keeping
    # >= 2 grid steps (pipeline overlap + both v7x TensorCores busy).
    Nb = 1
    for cand in (4, 2):
        if N % cand == 0 and N // cand >= 2:
            Nb = cand
            break

    # Padded NHWC bf16 input: transpose+pad+cast fuse into one XLA copy; with
    # allow_input_fusion below, XLA may fold it into the pallas input DMA.
    xp = jnp.pad(jnp.transpose(x_nchw, (0, 2, 3, 1)),
                 ((0, 0), (pad, pad), (pad, pad), (0, 0))).astype(jnp.bfloat16)

    # ---- fold 3 ACB branches + 4 BatchNorms into one KxK weight and bias ----
    w_sq = params["w_sq"].astype(jnp.float32)                       # (Cout,Cin,K,K)
    w_ver = jnp.zeros((Cout, Cin, K, K), jnp.float32).at[:, :, :, K // 2].set(
        params["w_ver"][:, :, :, 0])                                # (Cout,Cin,K,1)
    w_hor = jnp.zeros((Cout, Cin, K, K), jnp.float32).at[:, :, K // 2, :].set(
        params["w_hor"][:, :, 0, :])                                # (Cout,Cin,1,K)
    (s_sq, b_sq), (s_ver, b_ver), (s_hor, b_hor), (s1, b1) = [
        _bn_fold(*params[n]) for n in ("bn_sq", "bn_ver", "bn_hor", "bn1")]

    def cscale(w, s):  # scale output channels
        return w * s[:, None, None, None]

    w_fused = cscale(cscale(w_sq, s_sq) + cscale(w_ver, s_ver) + cscale(w_hor, s_hor), s1)
    bias_fused = (b_sq + b_ver + b_hor) * s1 + b1                   # (Cout,)

    # (Cout, K*K*Cin); contraction index = (kh*K + kw)*Cin + c, matching the
    # im2col column order produced inside the kernel.
    w2d = jnp.transpose(w_fused, (0, 2, 3, 1)).reshape(Cout, K * K * Cin)
    w2d = w2d.astype(jnp.bfloat16)

    consts = jnp.stack(
        [bias_fused, params["prelu_alpha"].astype(jnp.float32)], axis=1)  # (Cout, 2)

    kernel = functools.partial(basic_block_kernel, K=K, stride=stride,
                               Ho=Ho, Wo=Wo, Nb=Nb)
    out = pl.pallas_call(
        kernel,
        out_shape=jax.ShapeDtypeStruct((N, Cout, M), out_dtype),
        grid_spec=pltpu.PrefetchScalarGridSpec(
            num_scalar_prefetch=0,
            grid=(N // Nb,),
            in_specs=[
                pl.BlockSpec((Nb, Hp, Wp, Cin), lambda n: (n, 0, 0, 0)),
                pl.BlockSpec((Cout, K * K * Cin), lambda n: (0, 0)),
                pl.BlockSpec((Cout, 2), lambda n: (0, 0)),
            ],
            out_specs=pl.BlockSpec((Nb, Cout, M), lambda n: (n, 0, 0)),
            scratch_shapes=[pltpu.VMEM((M, K * K * Cin), jnp.float32)],
        ),
        compiler_params=pltpu.CompilerParams(
            dimension_semantics=("parallel",),
            allow_input_fusion=[True, False, False],
        ),
    )(xp, w2d, consts)

    return out.reshape(N, Cout, Ho, Wo)                             # already NCHW


# ---------------------------------------------------------------------------
# Pure-JAX reference (mirrors the PyTorch branch structure exactly)
# ---------------------------------------------------------------------------
def basic_block_reference(x_nchw, params, *, K, stride, pad):
    dn = ("NCHW", "OIHW", "NCHW")

    def conv(x, w, padding):
        return lax.conv_general_dilated(
            x, w, window_strides=(stride, stride), padding=padding,
            dimension_numbers=dn, precision=lax.Precision.HIGHEST)

    def bn(x, p):
        s, b = _bn_fold(*p)
        return x * s[None, :, None, None] + b[None, :, None, None]

    sq = bn(conv(x_nchw, params["w_sq"], ((pad, pad), (pad, pad))), params["bn_sq"])
    off = pad - K // 2
    ver = bn(conv(x_nchw, params["w_ver"], ((pad, pad), (off, off))), params["bn_ver"])
    hor = bn(conv(x_nchw, params["w_hor"], ((off, off), (pad, pad))), params["bn_hor"])
    y = bn(sq + ver + hor, params["bn1"])
    a = params["prelu_alpha"][None, :, None, None]
    return jnp.where(y > 0, y, a * y)


# ---------------------------------------------------------------------------
def make_params(key, inplanes, planes, K):
    ks = jax.random.split(key, 12)

    def bn_params(k):
        k1, k2, k3, k4 = jax.random.split(k, 4)
        gamma = 0.5 + jax.random.uniform(k1, (planes,), jnp.float32)
        beta = 0.1 * jax.random.normal(k2, (planes,), jnp.float32)
        mean = 0.1 * jax.random.normal(k3, (planes,), jnp.float32)
        var = 0.5 + jax.random.uniform(k4, (planes,), jnp.float32)
        return (gamma, beta, mean, var)

    return {
        "w_sq": 0.1 * jax.random.normal(ks[0], (planes, inplanes, K, K), jnp.float32),
        "w_ver": 0.1 * jax.random.normal(ks[1], (planes, inplanes, K, 1), jnp.float32),
        "w_hor": 0.1 * jax.random.normal(ks[2], (planes, inplanes, 1, K), jnp.float32),
        "bn_sq": bn_params(ks[3]),
        "bn_ver": bn_params(ks[4]),
        "bn_hor": bn_params(ks[5]),
        "bn1": bn_params(ks[6]),
        "prelu_alpha": 0.25 * jnp.ones((planes,), jnp.float32),  # PyTorch default
    }


if __name__ == "__main__":
    # BasicBlock(inplanes=4, planes=8, kernel_size=3, stride=1, pad=1)
    N, Cin, H, W = 2, 4, 16, 16
    Cout, K, stride, pad = 8, 3, 1, 1

    key = jax.random.PRNGKey(0)
    kx, kp = jax.random.split(key)
    x = jax.random.normal(kx, (N, Cin, H, W), jnp.float32)
    params = make_params(kp, Cin, Cout, K)

    fwd = jax.jit(functools.partial(basic_block_forward, K=K, stride=stride, pad=pad))
    out = jax.block_until_ready(fwd(x, params))

    ref = jax.block_until_ready(
        basic_block_reference(x, params, K=K, stride=stride, pad=pad))

    assert out.shape == (N, Cout, H, W), out.shape
    np.testing.assert_allclose(np.asarray(out), np.asarray(ref), rtol=1e-2, atol=1e-2)
    print("KERNEL_OK")
</pallas_src>

<mosaic_0001>
module attributes {stable_mosaic.version = 11 : i64} {
  func.func @basic_block_kernel(%arg0: i32, %arg1: memref<1x18x18x4xbf16, #tpu.memory_space<vmem>>, %arg2: memref<8x36xbf16, #tpu.memory_space<vmem>>, %arg3: memref<8x2xf32, #tpu.memory_space<vmem>>, %arg4: memref<1x8x256xf32, #tpu.memory_space<vmem>>, %arg5: memref<256x36xf32, #tpu.memory_space<vmem>>) attributes {dimension_semantics = [#tpu.dimension_semantics<parallel>], iteration_bounds = array<i64: 2>, scalar_prefetch = 0 : i64, scratch_operands = 1 : i64, tpu.core_type = #tpu.core_type<tc>, window_params = [{transform_indices = @transform_0, window_bounds = array<i64: 1, 18, 18, 4>}, {pipeline_mode = #tpu.pipeline_mode<synchronous>, transform_indices = @transform_1, window_bounds = array<i64: 8, 36>}, {pipeline_mode = #tpu.pipeline_mode<synchronous>, transform_indices = @transform_2, window_bounds = array<i64: 8, 2>}, {transform_indices = @transform_3, window_bounds = array<i64: 1, 8, 256>}]} {
    %c0 = arith.constant 0 : index
    %c0_0 = arith.constant 0 : index
    %0 = vector.load %arg2[%c0, %c0_0] : memref<8x36xbf16, #tpu.memory_space<vmem>>, vector<8x36xbf16>
    %c0_1 = arith.constant 0 : index
    %c0_2 = arith.constant 0 : index
    %1 = vector.load %arg3[%c0_1, %c0_2] : memref<8x2xf32, #tpu.memory_space<vmem>>, vector<8x1xf32>
    %c0_3 = arith.constant 0 : index
    %c1 = arith.constant 1 : index
    %2 = vector.load %arg3[%c0_3, %c1] : memref<8x2xf32, #tpu.memory_space<vmem>>, vector<8x1xf32>
    %c0_4 = arith.constant 0 : index
    %c0_5 = arith.constant 0 : index
    %c0_6 = arith.constant 0 : index
    %c0_7 = arith.constant 0 : index
    %3 = vector.load %arg1[%c0_4, %c0_5, %c0_6, %c0_7] : memref<1x18x18x4xbf16, #tpu.memory_space<vmem>>, vector<1x18x18x4xbf16>
    %4 = vector.shape_cast %3 : vector<1x18x18x4xbf16> to vector<18x18x4xbf16>
    %5 = arith.extf %4 : vector<18x18x4xbf16> to vector<18x18x4xf32>
    %6 = vector.extract_strided_slice %5 {offsets = [0, 0, 0], sizes = [16, 16, 4], strides = [1, 1, 1]} : vector<18x18x4xf32> to vector<16x16x4xf32>
    %7 = vector.shape_cast %6 : vector<16x16x4xf32> to vector<256x4xf32>
    %c0_8 = arith.constant 0 : index
    %c0_9 = arith.constant 0 : index
    %8 = vector.load %arg5[%c0_8, %c0_9] : memref<256x36xf32, #tpu.memory_space<vmem>>, vector<256x4xf32>
    tpu.vector_store %arg5[%c0_8, %c0_9], %7 {strides = array<i32>} : memref<256x36xf32, #tpu.memory_space<vmem>>, vector<256x4xf32>,
    %9 = vector.extract_strided_slice %5 {offsets = [0, 1, 0], sizes = [16, 16, 4], strides = [1, 1, 1]} : vector<18x18x4xf32> to vector<16x16x4xf32>
    %10 = vector.shape_cast %9 : vector<16x16x4xf32> to vector<256x4xf32>
    %c0_10 = arith.constant 0 : index
    %c4 = arith.constant 4 : index
    %11 = vector.load %arg5[%c0_10, %c4] : memref<256x36xf32, #tpu.memory_space<vmem>>, vector<256x4xf32>
    tpu.vector_store %arg5[%c0_10, %c4], %10 {strides = array<i32>} : memref<256x36xf32, #tpu.memory_space<vmem>>, vector<256x4xf32>,
    %12 = vector.extract_strided_slice %5 {offsets = [0, 2, 0], sizes = [16, 16, 4], strides = [1, 1, 1]} : vector<18x18x4xf32> to vector<16x16x4xf32>
    %13 = vector.shape_cast %12 : vector<16x16x4xf32> to vector<256x4xf32>
    %c0_11 = arith.constant 0 : index
    %c8 = arith.constant 8 : index
    %14 = vector.load %arg5[%c0_11, %c8] : memref<256x36xf32, #tpu.memory_space<vmem>>, vector<256x4xf32>
    tpu.vector_store %arg5[%c0_11, %c8], %13 {strides = array<i32>} : memref<256x36xf32, #tpu.memory_space<vmem>>, vector<256x4xf32>,
    %15 = vector.extract_strided_slice %5 {offsets = [1, 0, 0], sizes = [16, 16, 4], strides = [1, 1, 1]} : vector<18x18x4xf32> to vector<16x16x4xf32>
    %16 = vector.shape_cast %15 : vector<16x16x4xf32> to vector<256x4xf32>
    %c0_12 = arith.constant 0 : index
    %c12 = arith.constant 12 : index
    %17 = vector.load %arg5[%c0_12, %c12] : memref<256x36xf32, #tpu.memory_space<vmem>>, vector<256x4xf32>
    tpu.vector_store %arg5[%c0_12, %c12], %16 {strides = array<i32>} : memref<256x36xf32, #tpu.memory_space<vmem>>, vector<256x4xf32>,
    %18 = vector.extract_strided_slice %5 {offsets = [1, 1, 0], sizes = [16, 16, 4], strides = [1, 1, 1]} : vector<18x18x4xf32> to vector<16x16x4xf32>
    %19 = vector.shape_cast %18 : vector<16x16x4xf32> to vector<256x4xf32>
    %c0_13 = arith.constant 0 : index
    %c16 = arith.constant 16 : index
    %20 = vector.load %arg5[%c0_13, %c16] : memref<256x36xf32, #tpu.memory_space<vmem>>, vector<256x4xf32>
    tpu.vector_store %arg5[%c0_13, %c16], %19 {strides = array<i32>} : memref<256x36xf32, #tpu.memory_space<vmem>>, vector<256x4xf32>,
    %21 = vector.extract_strided_slice %5 {offsets = [1, 2, 0], sizes = [16, 16, 4], strides = [1, 1, 1]} : vector<18x18x4xf32> to vector<16x16x4xf32>
    %22 = vector.shape_cast %21 : vector<16x16x4xf32> to vector<256x4xf32>
    %c0_14 = arith.constant 0 : index
    %c20 = arith.constant 20 : index
    %23 = vector.load %arg5[%c0_14, %c20] : memref<256x36xf32, #tpu.memory_space<vmem>>, vector<256x4xf32>
    tpu.vector_store %arg5[%c0_14, %c20], %22 {strides = array<i32>} : memref<256x36xf32, #tpu.memory_space<vmem>>, vector<256x4xf32>,
    %24 = vector.extract_strided_slice %5 {offsets = [2, 0, 0], sizes = [16, 16, 4], strides = [1, 1, 1]} : vector<18x18x4xf32> to vector<16x16x4xf32>
    %25 = vector.shape_cast %24 : vector<16x16x4xf32> to vector<256x4xf32>
    %c0_15 = arith.constant 0 : index
    %c24 = arith.constant 24 : index
    %26 = vector.load %arg5[%c0_15, %c24] : memref<256x36xf32, #tpu.memory_space<vmem>>, vector<256x4xf32>
    tpu.vector_store %arg5[%c0_15, %c24], %25 {strides = array<i32>} : memref<256x36xf32, #tpu.memory_space<vmem>>, vector<256x4xf32>,
    %27 = vector.extract_strided_slice %5 {offsets = [2, 1, 0], sizes = [16, 16, 4], strides = [1, 1, 1]} : vector<18x18x4xf32> to vector<16x16x4xf32>
    %28 = vector.shape_cast %27 : vector<16x16x4xf32> to vector<256x4xf32>
    %c0_16 = arith.constant 0 : index
    %c28 = arith.constant 28 : index
    %29 = vector.load %arg5[%c0_16, %c28] : memref<256x36xf32, #tpu.memory_space<vmem>>, vector<256x4xf32>
    tpu.vector_store %arg5[%c0_16, %c28], %28 {strides = array<i32>} : memref<256x36xf32, #tpu.memory_space<vmem>>, vector<256x4xf32>,
    %30 = vector.extract_strided_slice %5 {offsets = [2, 2, 0], sizes = [16, 16, 4], strides = [1, 1, 1]} : vector<18x18x4xf32> to vector<16x16x4xf32>
    %31 = vector.shape_cast %30 : vector<16x16x4xf32> to vector<256x4xf32>
    %c0_17 = arith.constant 0 : index
    %c32 = arith.constant 32 : index
    %32 = vector.load %arg5[%c0_17, %c32] : memref<256x36xf32, #tpu.memory_space<vmem>>, vector<256x4xf32>
    tpu.vector_store %arg5[%c0_17, %c32], %31 {strides = array<i32>} : memref<256x36xf32, #tpu.memory_space<vmem>>, vector<256x4xf32>,
    %c0_18 = arith.constant 0 : index
    %c0_19 = arith.constant 0 : index
    %33 = vector.load %arg5[%c0_18, %c0_19] : memref<256x36xf32, #tpu.memory_space<vmem>>, vector<256x36xf32>
    %34 = arith.truncf %33 : vector<256x36xf32> to vector<256x36xbf16>
    %cst = arith.constant dense<0.000000e+00> : vector<8x256xf32>
    %35 = tpu.matmul %0, %34, %cst {dimension_numbers = #tpu.dot_dimension_numbers<[1], [1], [0], [0], [0, 0, 1, 0], [], []>} : vector<8x36xbf16>, vector<256x36xbf16>, vector<8x256xf32> -> vector<8x256xf32>
    %36 = vector.broadcast %1 : vector<8x1xf32> to vector<8x256xf32>
    %37 = arith.addf %35, %36 : vector<8x256xf32>
    %cst_20 = arith.constant 0.000000e+00 : f32
    %38 = vector.broadcast %cst_20 : f32 to vector<8x256xf32>
    %39 = arith.cmpf ogt, %37, %38 : vector<8x256xf32>
    %40 = vector.broadcast %2 : vector<8x1xf32> to vector<8x256xf32>
    %41 = arith.mulf %40, %37 : vector<8x256xf32>
    %42 = arith.select %39, %37, %41 : vector<8x256xi1>, vector<8x256xf32>
    %c0_21 = arith.constant 0 : index
    %c0_22 = arith.constant 0 : index
    %c0_23 = arith.constant 0 : index
    %43 = vector.load %arg4[%c0_21, %c0_22, %c0_23] : memref<1x8x256xf32, #tpu.memory_space<vmem>>, vector<1x8x256xf32>
    %44 = vector.shape_cast %43 : vector<1x8x256xf32> to vector<8x256xf32>
    %45 = vector.shape_cast %42 : vector<8x256xf32> to vector<1x8x256xf32>
    tpu.vector_store %arg4[%c0_21, %c0_22, %c0_23], %45 {strides = array<i32>} : memref<1x8x256xf32, #tpu.memory_space<vmem>>, vector<1x8x256xf32>,
    return
  }
  func.func @transform_0(%arg0: i32) -> (i32, i32, i32, i32) {
    %c0_i32 = arith.constant 0 : i32
    %c0_i32_0 = arith.constant 0 : i32
    %c0_i32_1 = arith.constant 0 : i32
    %c0_i32_2 = arith.constant 0 : i32
    return %arg0, %c0_i32, %c0_i32_0, %c0_i32_1 : i32, i32, i32, i32
  }
  func.func @transform_1(%arg0: i32) -> (i32, i32) {
    %c0_i32 = arith.constant 0 : i32
    %c0_i32_0 = arith.constant 0 : i32
    %c0_i32_1 = arith.constant 0 : i32
    return %c0_i32, %c0_i32_0 : i32, i32
  }
  func.func @transform_2(%arg0: i32) -> (i32, i32) {
    %c0_i32 = arith.constant 0 : i32
    %c0_i32_0 = arith.constant 0 : i32
    %c0_i32_1 = arith.constant 0 : i32
    return %c0_i32, %c0_i32_0 : i32, i32
  }
  func.func @transform_3(%arg0: i32) -> (i32, i32, i32) {
    %c0_i32 = arith.constant 0 : i32
    %c0_i32_0 = arith.constant 0 : i32
    %c0_i32_1 = arith.constant 0 : i32
    return %arg0, %c0_i32, %c0_i32_0 : i32, i32, i32
  }
}

</mosaic_0001>

<llo_original>
// kernel: basic_block_forward.2
$region0: #{basic_block_forward.2}
  #allocation0 [shape = 'u32[]', space=smem, size = 0x4, offset = 0x4, fixed_abs, tag = 'smem constant byte address 0x4 - core index']
  #allocation1 [shape = 'u32[144,128]{1,0:T(1,128)}', space=vmem, size = 0x12000, scoped, tag = 'internal scratch']
  #allocation2 [shape = 'f32[256,36]{1,0:T(8,128)}', space=vmem, size = 0x20000, scoped, tag = 'scratch operand']
  #allocation3 [shape = 'u32[2048]{0}', space=vmem, size = 0x2000, scoped, tag = 'scoped memory for basic_block_forward.2']
  #allocation4 [shape = 'u32[2048]{0}', space=vmem, size = 0x2000, scoped, tag = 'scoped memory for basic_block_forward.2']
  #allocation5 [shape = 'u32[2048]{0}', space=vmem, size = 0x2000, scoped, tag = 'scoped memory for basic_block_forward.2']
  #allocation6 [shape = 'u32[2048]{0}', space=vmem, size = 0x2000, scoped, tag = 'scoped memory for basic_block_forward.2']
  #allocation7 [shape = 'u32[2048]{0}', space=vmem, size = 0x2000, scoped, tag = 'scoped memory for basic_block_forward.2']
  %s0 = inlined_call_operand.vmem [shape: bf16[8,36], index: 0, kind: input, shape index: {}]
  %s1 = inlined_call_operand.vmem [shape: f32[8,2], index: 1, kind: input, shape index: {}]
  %s2 = inlined_call_operand.vmem [shape: bf16[2,16,16,4], index: 2, kind: input, shape index: {}]
  %s3 = inlined_call_operand.<no memory space> [shape: bf16[], index: 3, kind: input, shape index: {}]
  %s4 = inlined_call_operand.vmem [shape: f32[2,8,256], index: 4, kind: output, shape index: {}]
  %s5 = sld [smem:[#allocation0]]
  $region45: #{basic_block_forward.2} parent=0
    _
  %s7 = ssub.s32 1, %s5
  %s8 = scalar_select 0, %s7, %s5
  %v9 = vstv %s3
  %v10 = vunpack.i.l.bf16 %v9
  %v12 = vunpack.i.h.bf16 %v9
  loop: start=0, step=1, limit=4
  $region2: #{basic_block_forward.2} parent=0 // loop_pre_header
    _
  $region3: #{basic_block_forward.2} parent=0 // loop_header
    %s15 = sphi 0, %s19
    %p16 = scmp.ge.s32.totalorder %s15, 4
    %s25 = sphi 0, %s27
    %s28 = sphi 0, %s25
    %s29 = sphi 0, %s28
    %s45 = sphi 0, %s29
    %s49 = sphi 0, %s49
    %s51 = sphi 0, %s49
    %s52 = sphi 0, %s51
    %s66 = sphi 0, %s52
    %s70 = sphi 0, %s70
    %s72 = sphi 0, %s70
    %s73 = sphi 0, %s72
    %s87 = sphi 0, %s73
    %s93 = sphi 0, %s95
    %s96 = sphi 0, %s93
    %s97 = sphi 0, %s96
    %s113 = sphi 0, %s97
  $region4: #{basic_block_forward.2} parent=0 // loop_header_branch
    %18 = sbr.rel (%p16) target = $region8
  $region5: #{basic_block_forward.2} parent=0 // loop_body
    %s20 = ssub.s32 %s15, 1
    %s21 = ssub.s32 %s15, 2
    %s22 = sadd.s32 %s15, 1
    %s23 = ssub.s32 %s15, %s22
    %p24 = scmp.eq.s32.totalorder %s23, 0
    %s26 = sadd.s32 %s25, 1
    %s27 = scalar_select %p24, %s25, %s26
    %p30 = pneg %p24
    %p31 = scmp.eq.s32.totalorder %s15, 1
    %p32 = por %p30, %p31
    %p33 = scmp.ne.s32.totalorder %s25, %s28
    %p34 = scmp.eq.s32.totalorder %s15, 0
    %p35 = por %p33, %p34
    %p36 = scmp.ne.s32.totalorder %s25, %s28
    %p37 = scmp.eq.s32.totalorder %s20, 1
    %p38 = por %p36, %p37
    %p39 = scmp.ne.s32.totalorder %s28, %s29
    %p40 = scmp.eq.s32.totalorder %s20, 0
    %p41 = por %p39, %p40
    %p42 = scmp.ne.s32.totalorder %s28, %s29
    %p43 = scmp.eq.s32.totalorder %s21, 1
    %p44 = por %p42, %p43
    %p46 = scmp.ne.s32.totalorder %s29, %s45
    %p47 = scmp.eq.s32.totalorder %s21, 0
    %p48 = por %p46, %p47
    %s50 = sadd.s32 %s49, 1
    %p53 = scmp.eq.s32.totalorder %s15, 1
    %p54 = scmp.ne.s32.totalorder %s49, %s51
    %p55 = scmp.eq.s32.totalorder %s15, 0
    %p56 = por %p54, %p55
    %p57 = scmp.ne.s32.totalorder %s49, %s51
    %p58 = scmp.eq.s32.totalorder %s20, 1
    %p59 = por %p57, %p58
    %p60 = scmp.ne.s32.totalorder %s51, %s52
    %p61 = scmp.eq.s32.totalorder %s20, 0
    %p62 = por %p60, %p61
    %p63 = scmp.ne.s32.totalorder %s51, %s52
    %p64 = scmp.eq.s32.totalorder %s21, 1
    %p65 = por %p63, %p64
    %p67 = scmp.ne.s32.totalorder %s52, %s66
    %p68 = scmp.eq.s32.totalorder %s21, 0
    %p69 = por %p67, %p68
    %s71 = sadd.s32 %s70, 1
    %p74 = scmp.eq.s32.totalorder %s15, 1
    %p75 = scmp.ne.s32.totalorder %s70, %s72
    %p76 = scmp.eq.s32.totalorder %s15, 0
    %p77 = por %p75, %p76
    %p78 = scmp.ne.s32.totalorder %s70, %s72
    %p79 = scmp.eq.s32.totalorder %s20, 1
    %p80 = por %p78, %p79
    %p81 = scmp.ne.s32.totalorder %s72, %s73
    %p82 = scmp.eq.s32.totalorder %s20, 0
    %p83 = por %p81, %p82
    %p84 = scmp.ne.s32.totalorder %s72, %s73
    %p85 = scmp.eq.s32.totalorder %s21, 1
    %p86 = por %p84, %p85
    %p88 = scmp.ne.s32.totalorder %s73, %s87
    %p89 = scmp.eq.s32.totalorder %s21, 0
    %p90 = por %p88, %p89
    %s91 = ssub.s32 %s15, %s22
    %p92 = scmp.eq.s32.totalorder %s91, 0
    %s94 = sadd.s32 %s93, 1
    %s95 = scalar_select %p92, %s93, %s94
    %p98 = pneg %p92
    %p99 = scmp.eq.s32.totalorder %s15, 1
    %p100 = por %p98, %p99
    %p101 = scmp.ne.s32.totalorder %s93, %s96
    %p102 = scmp.eq.s32.totalorder %s15, 0
    %p103 = por %p101, %p102
    %p104 = scmp.ne.s32.totalorder %s93, %s96
    %p105 = scmp.eq.s32.totalorder %s20, 1
    %p106 = por %p104, %p105
    %p107 = scmp.ne.s32.totalorder %s96, %s97
    %p108 = scmp.eq.s32.totalorder %s20, 0
    %p109 = por %p107, %p108
    %p110 = scmp.ne.s32.totalorder %s96, %s97
    %p111 = scmp.eq.s32.totalorder %s21, 1
    %p112 = por %p110, %p111
    %p114 = scmp.ne.s32.totalorder %s97, %s113
    %p115 = scmp.eq.s32.totalorder %s21, 0
    %p116 = por %p114, %p115
    %p117 = scmp.le.s32.totalorder 1, %s15
    %p118 = scmp.lt.s32.totalorder %s15, 3
    %p119 = pnand %p117, %p118
    %p120 = pneg %p119
    // Predicated region
    $region9: #{basic_block_forward.2} parent=5 // pred_check
      _
    $region10: #{basic_block_forward.2} parent=5 // pred_check_branch
      %122 = sbr.rel (%p119) target = $region12
    $region11: #{basic_block_forward.2} parent=5 // pred_region
      %s123 = ssub.s32 %s15, 1
      // Predicated region
      $region13: #{basic_block_forward.2} parent=11 // pred_check
        %p124 = pneg %p62
      $region14: #{basic_block_forward.2} parent=11 // pred_check_branch
        %126 = sbr.rel (%p124) target = $region16
      $region15: #{basic_block_forward.2} parent=11 // pred_region
        _
      $region16: #{basic_block_forward.2} parent=11 // pred_fallthru
        _
      // Predicated region
      $region17: #{basic_block_forward.2} parent=11 // pred_check
        %p127 = pneg %p83
      $region18: #{basic_block_forward.2} parent=11 // pred_check_branch
        %129 = sbr.rel (%p127) target = $region20
      $region19: #{basic_block_forward.2} parent=11 // pred_region
        _
      $region20: #{basic_block_forward.2} parent=11 // pred_fallthru
        _
    $region12: #{basic_block_forward.2} parent=5 // pred_fallthru
      _
    %p130 = scmp.lt.s32.totalorder %s15, 2
    // Predicated region
    $region21: #{basic_block_forward.2} parent=5 // pred_check
      %p131 = pneg %p130
    $region22: #{basic_block_forward.2} parent=5 // pred_check_branch
      %133 = sbr.rel (%p131) target = $region24
    $region23: #{basic_block_forward.2} parent=5 // pred_region
      // Predicated region
      $region25: #{basic_block_forward.2} parent=23 // pred_check
        %p134 = pneg %p35
      $region26: #{basic_block_forward.2} parent=23 // pred_check_branch
        %136 = sbr.rel (%p134) target = $region28
      $region27: #{basic_block_forward.2} parent=23 // pred_region
        %p137 = scmp.lt.s32.totalorder %s15, 1
        %s138 = scalar_select %p137, %s15, 1
        %s139 = smul.addr %s138, 32
        %s140 = sadd.s32 4294967293, %s139
        %s141 = smul.addr %s140, 4
        %s142 = scalar_lea.vmem %s2, %s141
      $region28: #{basic_block_forward.2} parent=23 // pred_fallthru
        _
    $region24: #{basic_block_forward.2} parent=5 // pred_fallthru
      _
    %p143 = scmp.le.s32.totalorder 1, %s15
    %p144 = scmp.lt.s32.totalorder %s15, 3
    %p145 = pnand %p143, %p144
    %p146 = pneg %p145
    // Predicated region
    $region29: #{basic_block_forward.2} parent=5 // pred_check
      _
    $region30: #{basic_block_forward.2} parent=5 // pred_check_branch
      %148 = sbr.rel (%p145) target = $region32
    $region31: #{basic_block_forward.2} parent=5 // pred_region
      #allocation8 [shape = 'u8[110592]{0}', space=vmem, size = 0x1b000, dematerialized = true, scoped, tag = 'FusionAdapter Buffer %fusion.1 = bf16[2,18,18,4]{3,2,1,0:T(8,128)(2,1)} fusion(%param_2.1, %param_3), kind=kLoop, calls=%fused_computation.1.clone, metadata={op_name="jit(basic_block_forward)/jit(_pad)/pad" stack_frame_id=8}']
      %s149 = ssub.s32 %s15, 1
      %p150 = scmp.lt.s32.totalorder %s20, 1
      %s151 = scalar_select %p150, %s20, 1
      %s152 = smul.addr %s151, 32
      %s153 = sadd.s32 4294967293, %s152
      %s154 = smul.addr %s153, 4
      %s155 = scalar_lea.vmem %s2, %s154
      %p156 = pneg %p41
      %p157 = pneg %p38
      %p158 = pneg %p62
      %p159 = pneg %p59
      %p160 = pneg %p83
      %p161 = pneg %p80
      %p162 = pneg %p109
      %p163 = pneg %p106
      %p164 = scmp.lt.s32.totalorder %s20, 1
      %s165 = scalar_select %p164, %s20, 1
      %s166 = smul.addr %s165, 2
      %s167 = smul.addr %s166, 8
      %s168 = scalar_lea.vmem %s4, %s167
      %p169 = scmp.lt.s32.totalorder %s20, 1
      %s170 = scalar_select %p169, %s20, 1
      %s171 = smul.addr %s170, 32
      %s172 = sadd.s32 4294967293, %s171
      %s173 = smul.addr %s172, 4
      %s174 = scalar_lea.vmem %s2, %s173
      %p175 = scmp.lt.s32.totalorder %s20, 1
      %s176 = scalar_select %p175, %s20, 1
      %s177 = smul.addr %s176, 2
      %s178 = smul.addr %s177, 8
      %s179 = scalar_lea.vmem %s4, %s178
      %s181 = sand.u32 0, 85
      %s182 = sshrl.u32 %s181, 1
      %s183 = sor.u32 %s181, %s182
      %s184 = sand.u32 51, %s183
      %s185 = sshrl.u32 %s184, 2
      %s186 = sor.u32 %s184, %s185
      %s187 = sand.u32 15, %s186
      %v188 = vld [vmem:[%s174] sm:%s187]
      %v189 = vunpack.c.l.bf16 %v188
      %v190 = vunpack.c.h.bf16 %v188
      %s191 = scalar_lea.vmem %s174, 4
      %s193 = sand.u32 0, 85
      %s194 = sshrl.u32 %s193, 1
      %s195 = sor.u32 %s193, %s194
      %s196 = sand.u32 51, %s195
      %s197 = sshrl.u32 %s196, 2
      %s198 = sor.u32 %s196, %s197
      %s199 = sand.u32 15, %s198
      %v200 = vld [vmem:[%s191] sm:%s199]
      %v201 = vunpack.c.l.bf16 %v200
      %v202 = vunpack.c.h.bf16 %v200
      %v203 = vpack.c.bf16 0.0, %v10
      %205 = vst [vmem:[#allocation8] sm:$0xf] %v203
      %s206 = scalar_lea.vmem %s174, 8
      %s208 = sand.u32 0, 85
      %s209 = sshrl.u32 %s208, 1
      %s210 = sor.u32 %s208, %s209
      %s211 = sand.u32 51, %s210
      %s212 = sshrl.u32 %s211, 2
      %s213 = sor.u32 %s211, %s212
      %s214 = sand.u32 15, %s213
      %v215 = vld [vmem:[%s206] sm:%s214]
      %v216 = vunpack.c.l.bf16 %v215
      %v217 = vunpack.c.h.bf16 %v215
      %s218 = scalar_lea.vmem [#allocation8], 4
      %v219 = vpack.c.bf16 0.0, %v10
      %221 = vst [vmem:[%s218] sm:$0xf] %v219
      %s222 = scalar_lea.vmem [#allocation8], 8
      %v223 = vpack.c.bf16 0.0, %v10
      %225 = vst [vmem:[%s222] sm:$0xf] %v223
      %s226 = scalar_lea.vmem %s174, 8
      %s228 = sand.u32 0, 85
      %s229 = sshrl.u32 %s228, 1
      %s230 = sor.u32 %s228, %s229
      %s231 = sand.u32 51, %s230
      %s232 = sshrl.u32 %s231, 2
      %s233 = sor.u32 %s231, %s232
      %s234 = sand.u32 15, %s233
      %v235 = vld [vmem:[%s226] sm:%s234]
      %v236 = vunpack.c.l.bf16 %v235
      %v237 = vunpack.c.h.bf16 %v235
      %s238 = scalar_lea.vmem %s174, 12
      %s240 = sor.u32 255, 127
      %s241 = sand.u32 %s240, 85
      %s242 = sshrl.u32 %s241, 1
      %s243 = sor.u32 %s241, %s242
      %s244 = sand.u32 51, %s243
      %s245 = sshrl.u32 %s244, 2
      %s246 = sor.u32 %s244, %s245
      %s247 = sand.u32 15, %s246
      %v248 = vld [vmem:[%s238] sm:%s247]
      %v249 = vunpack.c.l.bf16 %v248
      %v250 = vunpack.c.h.bf16 %v248
      %v251 = vlaneseq
      %v252 = vand.u32 %v251, 127
      %vm254 = vcmp.lt.s32.totalorder %v252, 4
      %v255 = vsel %vm254, %v249, %v10
      %vm256 = vcmask 1046528
      %v257 = vsel %vm256, %v255, %v10
      %v258 = vrot.slane %v257, 7
      %s259 = scalar_lea.vmem [#allocation8], 12
      %v260 = vpack.c.bf16 0.0, %v258
      %262 = vst [vmem:[%s259] sm:$0xf] %v260
      %s263 = scalar_lea.vmem %s174, 16
      %s265 = sor.u32 255, 127
      %s266 = sand.u32 %s265, 85
      %s267 = sshrl.u32 %s266, 1
      %s268 = sor.u32 %s266, %s267
      %s269 = sand.u32 51, %s268
      %s270 = sshrl.u32 %s269, 2
      %s271 = sor.u32 %s269, %s270
      %s272 = sand.u32 15, %s271
      %v273 = vld [vmem:[%s263] sm:%s272]
      %v274 = vunpack.c.l.bf16 %v273
      %v275 = vunpack.c.h.bf16 %v273
      %v276 = vlaneseq
      %v277 = vand.u32 %v276, 127
      %vm279 = vcmp.lt.s32.totalorder %v277, 4
      %v280 = vsel %vm279, %v274, %v10
      %vm281 = vcmask 1046528
      %v282 = vsel %vm281, %v280, %v255
      %v283 = vrot.slane %v282, 7
      %s284 = scalar_lea.vmem [#allocation8], 16
      %v285 = vpack.c.bf16 0.0, %v283
      %287 = vst [vmem:[%s284] sm:$0xf] %v285
      %vm288 = vcmask 1046528
      %v289 = vsel %vm288, %v10, %v280
      %v290 = vrot.slane %v289, 7
      %s291 = scalar_lea.vmem [#allocation8], 20
      %v292 = vpack.c.bf16 0.0, %v290
      %294 = vst [vmem:[%s291] sm:$0xf] %v292
      %s295 = scalar_lea.vmem %s174, 16
      %s297 = sand.u32 0, 85
      %s298 = sshrl.u32 %s297, 1
      %s299 = sor.u32 %s297, %s298
      %s300 = sand.u32 51, %s299
      %s301 = sshrl.u32 %s300, 2
      %s302 = sor.u32 %s300, %s301
      %s303 = sand.u32 15, %s302
      %v304 = vld [vmem:[%s295] sm:%s303]
      %v305 = vunpack.c.l.bf16 %v304
      %v306 = vunpack.c.h.bf16 %v304
      %s307 = scalar_lea.vmem %s174, 20
      %s309 = sor.u32 255, 127
      %s310 = sand.u32 %s309, 85
      %s311 = sshrl.u32 %s310, 1
      %s312 = sor.u32 %s310, %s311
      %s313 = sand.u32 51, %s312
      %s314 = sshrl.u32 %s313, 2
      %s315 = sor.u32 %s313, %s314
      %s316 = sand.u32 15, %s315
      %v317 = vld [vmem:[%s307] sm:%s316]
      %v318 = vunpack.c.l.bf16 %v317
      %v319 = vunpack.c.h.bf16 %v317
      %v320 = vlaneseq
      %v321 = vand.u32 %v320, 127
      %vm323 = vcmp.lt.s32.totalorder %v321, 4
      %v324 = vsel %vm323, %v318, %v10
      %vm325 = vcmask 1046528
      %v326 = vsel %vm325, %v324, %v10
      %v327 = vrot.slane %v326, 7
      %s328 = scalar_lea.vmem [#allocation8], 24
      %v329 = vpack.c.bf16 0.0, %v327
      %331 = vst [vmem:[%s328] sm:$0xf] %v329
      %s332 = scalar_lea.vmem %s174, 24
      %s334 = sor.u32 255, 127
      %s335 = sand.u32 %s334, 85
      %s336 = sshrl.u32 %s335, 1
      %s337 = sor.u32 %s335, %s336
      %s338 = sand.u32 51, %s337
      %s339 = sshrl.u32 %s338, 2
      %s340 = sor.u32 %s338, %s339
      %s341 = sand.u32 15, %s340
      %v342 = vld [vmem:[%s332] sm:%s341]
      %v343 = vunpack.c.l.bf16 %v342
      %v344 = vunpack.c.h.bf16 %v342
      %v345 = vlaneseq
      %v346 = vand.u32 %v345, 127
      %vm348 = vcmp.lt.s32.totalorder %v346, 4
      %v349 = vsel %vm348, %v343, %v10
      %vm350 = vcmask 1046528
      %v351 = vsel %vm350, %v349, %v324
      %v352 = vrot.slane %v351, 7
      %s353 = scalar_lea.vmem [#allocation8], 28
      %v354 = vpack.c.bf16 0.0, %v352
      %356 = vst [vmem:[%s353] sm:$0xf] %v354
      %vm357 = vcmask 1046528
      %v358 = vsel %vm357, %v10, %v349
      %v359 = vrot.slane %v358, 7
      %s360 = scalar_lea.vmem [#allocation8], 32
      %v361 = vpack.c.bf16 0.0, %v359
      %363 = vst [vmem:[%s360] sm:$0xf] %v361
      %s364 = scalar_lea.vmem %s174, 24
      %s366 = sand.u32 0, 85
      %s367 = sshrl.u32 %s366, 1
      %s368 = sor.u32 %s366, %s367
      %s369 = sand.u32 51, %s368
      %s370 = sshrl.u32 %s369, 2
      %s371 = sor.u32 %s369, %s370
      %s372 = sand.u32 15, %s371
      %v373 = vld [vmem:[%s364] sm:%s372]
      %v374 = vunpack.c.l.bf16 %v373
      %v375 = vunpack.c.h.bf16 %v373
      %s376 = scalar_lea.vmem %s174, 28
      %s378 = sor.u32 255, 127
      %s379 = sand.u32 %s378, 85
      %s380 = sshrl.u32 %s379, 1
      %s381 = sor.u32 %s379, %s380
      %s382 = sand.u32 51, %s381
      %s383 = sshrl.u32 %s382, 2
      %s384 = sor.u32 %s382, %s383
      %s385 = sand.u32 15, %s384
      %v386 = vld [vmem:[%s376] sm:%s385]
      %v387 = vunpack.c.l.bf16 %v386
      %v388 = vunpack.c.h.bf16 %v386
      %v389 = vlaneseq
      %v390 = vand.u32 %v389, 127
      %vm392 = vcmp.lt.s32.totalorder %v390, 4
      %v393 = vsel %vm392, %v387, %v10
      %vm394 = vcmask 1046528
      %v395 = vsel %vm394, %v393, %v10
      %v396 = vrot.slane %v395, 7
      %s397 = scalar_lea.vmem [#allocation8], 36
      %v398 = vpack.c.bf16 0.0, %v396
      %400 = vst [vmem:[%s397] sm:$0xf] %v398
      %s401 = scalar_lea.vmem %s174, 32
      %s403 = sor.u32 255, 127
      %s404 = sand.u32 %s403, 85
      %s405 = sshrl.u32 %s404, 1
      %s406 = sor.u32 %s404, %s405
      %s407 = sand.u32 51, %s406
      %s408 = sshrl.u32 %s407, 2
      %s409 = sor.u32 %s407, %s408
      %s410 = sand.u32 15, %s409
      %v411 = vld [vmem:[%s401] sm:%s410]
      %v412 = vunpack.c.l.bf16 %v411
      %v413 = vunpack.c.h.bf16 %v411
      %v414 = vlaneseq
      %v415 = vand.u32 %v414, 127
      %vm417 = vcmp.lt.s32.totalorder %v415, 4
      %v418 = vsel %vm417, %v412, %v10
      %vm419 = vcmask 1046528
      %v420 = vsel %vm419, %v418, %v393
      %v421 = vrot.slane %v420, 7
      %s422 = scalar_lea.vmem [#allocation8], 40
      %v423 = vpack.c.bf16 0.0, %v421
      %425 = vst [vmem:[%s422] sm:$0xf] %v423
      %vm426 = vcmask 1046528
      %v427 = vsel %vm426, %v10, %v418
      %v428 = vrot.slane %v427, 7
      %s429 = scalar_lea.vmem [#allocation8], 44
      %v430 = vpack.c.bf16 0.0, %v428
      %432 = vst [vmem:[%s429] sm:$0xf] %v430
      %s433 = scalar_lea.vmem %s174, 32
      %s435 = sand.u32 0, 85
      %s436 = sshrl.u32 %s435, 1
      %s437 = sor.u32 %s435, %s436
      %s438 = sand.u32 51, %s437
      %s439 = sshrl.u32 %s438, 2
      %s440 = sor.u32 %s438, %s439
      %s441 = sand.u32 15, %s440
      %v442 = vld [vmem:[%s433] sm:%s441]
      %v443 = vunpack.c.l.bf16 %v442
      %v444 = vunpack.c.h.bf16 %v442
      %s445 = scalar_lea.vmem %s174, 36
      %s447 = sor.u32 255, 127
      %s448 = sand.u32 %s447, 85
      %s449 = sshrl.u32 %s448, 1
      %s450 = sor.u32 %s448, %s449
      %s451 = sand.u32 51, %s450
      %s452 = sshrl.u32 %s451, 2
      %s453 = sor.u32 %s451, %s452
      %s454 = sand.u32 15, %s453
      %v455 = vld [vmem:[%s445] sm:%s454]
      %v456 = vunpack.c.l.bf16 %v455
      %v457 = vunpack.c.h.bf16 %v455
      %v458 = vlaneseq
      %v459 = vand.u32 %v458, 127
      %vm461 = vcmp.lt.s32.totalorder %v459, 4
      %v462 = vsel %vm461, %v456, %v10
      %vm463 = vcmask 1046528
      %v464 = vsel %vm463, %v462, %v10
      %v465 = vrot.slane %v464, 7
      %s466 = scalar_lea.vmem [#allocation8], 48
      %v467 = vpack.c.bf16 0.0, %v465
      %469 = vst [vmem:[%s466] sm:$0xf] %v467
      %s470 = scalar_lea.vmem %s174, 40
      %s472 = sor.u32 255, 127
      %s473 = sand.u32 %s472, 85
      %s474 = sshrl.u32 %s473, 1
      %s475 = sor.u32 %s473, %s474
      %s476 = sand.u32 51, %s475
      %s477 = sshrl.u32 %s476, 2
      %s478 = sor.u32 %s476, %s477
      %s479 = sand.u32 15, %s478
      %v480 = vld [vmem:[%s470] sm:%s479]
      %v481 = vunpack.c.l.bf16 %v480
      %v482 = vunpack.c.h.bf16 %v480
      %v483 = vlaneseq
      %v484 = vand.u32 %v483, 127
      %vm486 = vcmp.lt.s32.totalorder %v484, 4
      %v487 = vsel %vm486, %v481, %v10
      %vm488 = vcmask 1046528
      %v489 = vsel %vm488, %v487, %v462
      %v490 = vrot.slane %v489, 7
      %s491 = scalar_lea.vmem [#allocation8], 52
      %v492 = vpack.c.bf16 0.0, %v490
      %494 = vst [vmem:[%s491] sm:$0xf] %v492
      %vm495 = vcmask 1046528
      %v496 = vsel %vm495, %v10, %v487
      %v497 = vrot.slane %v496, 7
      %s498 = scalar_lea.vmem [#allocation8], 56
      %v499 = vpack.c.bf16 0.0, %v497
      %501 = vst [vmem:[%s498] sm:$0xf] %v499
      %s502 = scalar_lea.vmem %s174, 40
      %s504 = sand.u32 0, 85
      %s505 = sshrl.u32 %s504, 1
      %s506 = sor.u32 %s504, %s505
      %s507 = sand.u32 51, %s506
      %s508 = sshrl.u32 %s507, 2
      %s509 = sor.u32 %s507, %s508
      %s510 = sand.u32 15, %s509
      %v511 = vld [vmem:[%s502] sm:%s510]
      %v512 = vunpack.c.l.bf16 %v511
      %v513 = vunpack.c.h.bf16 %v511
      %s514 = scalar_lea.vmem %s174, 44
      %s516 = sor.u32 255, 127
      %s517 = sand.u32 %s516, 85
      %s518 = sshrl.u32 %s517, 1
      %s519 = sor.u32 %s517, %s518
      %s520 = sand.u32 51, %s519
      %s521 = sshrl.u32 %s520, 2
      %s522 = sor.u32 %s520, %s521
      %s523 = sand.u32 15, %s522
      %v524 = vld [vmem:[%s514] sm:%s523]
      %v525 = vunpack.c.l.bf16 %v524
      %v526 = vunpack.c.h.bf16 %v524
      %v527 = vlaneseq
      %v528 = vand.u32 %v527, 127
      %vm530 = vcmp.lt.s32.totalorder %v528, 4
      %v531 = vsel %vm530, %v525, %v10
      %vm532 = vcmask 1046528
      %v533 = vsel %vm532, %v531, %v10
      %v534 = vrot.slane %v533, 7
      %s535 = scalar_lea.vmem [#allocation8], 60
      %v536 = vpack.c.bf16 0.0, %v534
      %538 = vst [vmem:[%s535] sm:$0xf] %v536
      %s539 = scalar_lea.vmem %s174, 48
      %s541 = sor.u32 255, 127
      %s542 = sand.u32 %s541, 85
      %s543 = sshrl.u32 %s542, 1
      %s544 = sor.u32 %s542, %s543
      %s545 = sand.u32 51, %s544
      %s546 = sshrl.u32 %s545, 2
      %s547 = sor.u32 %s545, %s546
      %s548 = sand.u32 15, %s547
      %v549 = vld [vmem:[%s539] sm:%s548]
      %v550 = vunpack.c.l.bf16 %v549
      %v551 = vunpack.c.h.bf16 %v549
      %v552 = vlaneseq
      %v553 = vand.u32 %v552, 127
      %vm555 = vcmp.lt.s32.totalorder %v553, 4
      %v556 = vsel %vm555, %v550, %v10
      %vm557 = vcmask 1046528
      %v558 = vsel %vm557, %v556, %v531
      %v559 = vrot.slane %v558, 7
      %s560 = scalar_lea.vmem [#allocation8], 64
      %v561 = vpack.c.bf16 0.0, %v559
      %563 = vst [vmem:[%s560] sm:$0xf] %v561
      %vm564 = vcmask 1046528
      %v565 = vsel %vm564, %v10, %v556
      %v566 = vrot.slane %v565, 7
      %s567 = scalar_lea.vmem [#allocation8], 68
      %v568 = vpack.c.bf16 0.0, %v566
      %570 = vst [vmem:[%s567] sm:$0xf] %v568
      %s571 = scalar_lea.vmem %s174, 48
      %s573 = sand.u32 0, 85
      %s574 = sshrl.u32 %s573, 1
      %s575 = sor.u32 %s573, %s574
      %s576 = sand.u32 51, %s575
      %s577 = sshrl.u32 %s576, 2
      %s578 = sor.u32 %s576, %s577
      %s579 = sand.u32 15, %s578
      %v580 = vld [vmem:[%s571] sm:%s579]
      %v581 = vunpack.c.l.bf16 %v580
      %v582 = vunpack.c.h.bf16 %v580
      %s583 = scalar_lea.vmem %s174, 52
      %s585 = sor.u32 255, 127
      %s586 = sand.u32 %s585, 85
      %s587 = sshrl.u32 %s586, 1
      %s588 = sor.u32 %s586, %s587
      %s589 = sand.u32 51, %s588
      %s590 = sshrl.u32 %s589, 2
      %s591 = sor.u32 %s589, %s590
      %s592 = sand.u32 15, %s591
      %v593 = vld [vmem:[%s583] sm:%s592]
      %v594 = vunpack.c.l.bf16 %v593
      %v595 = vunpack.c.h.bf16 %v593
      %v596 = vlaneseq
      %v597 = vand.u32 %v596, 127
      %vm599 = vcmp.lt.s32.totalorder %v597, 4
      %v600 = vsel %vm599, %v594, %v10
      %vm601 = vcmask 1046528
      %v602 = vsel %vm601, %v600, %v10
      %v603 = vrot.slane %v602, 7
      %s604 = scalar_lea.vmem [#allocation8], 72
      %v605 = vpack.c.bf16 0.0, %v603
      %607 = vst [vmem:[%s604] sm:$0xf] %v605
      %s608 = scalar_lea.vmem %s174, 56
      %s610 = sor.u32 255, 127
      %s611 = sand.u32 %s610, 85
      %s612 = sshrl.u32 %s611, 1
      %s613 = sor.u32 %s611, %s612
      %s614 = sand.u32 51, %s613
      %s615 = sshrl.u32 %s614, 2
      %s616 = sor.u32 %s614, %s615
      %s617 = sand.u32 15, %s616
      %v618 = vld [vmem:[%s608] sm:%s617]
      %v619 = vunpack.c.l.bf16 %v618
      %v620 = vunpack.c.h.bf16 %v618
      %v621 = vlaneseq
      %v622 = vand.u32 %v621, 127
      %vm624 = vcmp.lt.s32.totalorder %v622, 4
      %v625 = vsel %vm624, %v619, %v10
      %vm626 = vcmask 1046528
      %v627 = vsel %vm626, %v625, %v600
      %v628 = vrot.slane %v627, 7
      %s629 = scalar_lea.vmem [#allocation8], 76
      %v630 = vpack.c.bf16 0.0, %v628
      %632 = vst [vmem:[%s629] sm:$0xf] %v630
      %vm633 = vcmask 1046528
      %v634 = vsel %vm633, %v10, %v625
      %v635 = vrot.slane %v634, 7
      %s636 = scalar_lea.vmem [#allocation8], 80
      %v637 = vpack.c.bf16 0.0, %v635
      %639 = vst [vmem:[%s636] sm:$0xf] %v637
      %s640 = scalar_lea.vmem %s174, 56
      %s642 = sand.u32 0, 85
      %s643 = sshrl.u32 %s642, 1
      %s644 = sor.u32 %s642, %s643
      %s645 = sand.u32 51, %s644
      %s646 = sshrl.u32 %s645, 2
      %s647 = sor.u32 %s645, %s646
      %s648 = sand.u32 15, %s647
      %v649 = vld [vmem:[%s640] sm:%s648]
      %v650 = vunpack.c.l.bf16 %v649
      %v651 = vunpack.c.h.bf16 %v649
      %s652 = scalar_lea.vmem %s174, 60
      %s654 = sor.u32 255, 127
      %s655 = sand.u32 %s654, 85
      %s656 = sshrl.u32 %s655, 1
      %s657 = sor.u32 %s655, %s656
      %s658 = sand.u32 51, %s657
      %s659 = sshrl.u32 %s658, 2
      %s660 = sor.u32 %s658, %s659
      %s661 = sand.u32 15, %s660
      %v662 = vld [vmem:[%s652] sm:%s661]
      %v663 = vunpack.c.l.bf16 %v662
      %v664 = vunpack.c.h.bf16 %v662
      %v665 = vlaneseq
      %v666 = vand.u32 %v665, 127
      %vm668 = vcmp.lt.s32.totalorder %v666, 4
      %v669 = vsel %vm668, %v663, %v10
      %vm670 = vcmask 1046528
      %v671 = vsel %vm670, %v669, %v10
      %v672 = vrot.slane %v671, 7
      %s673 = scalar_lea.vmem [#allocation8], 84
      %v674 = vpack.c.bf16 0.0, %v672
      %676 = vst [vmem:[%s673] sm:$0xf] %v674
      %s677 = scalar_lea.vmem %s174, 64
      %s679 = sor.u32 255, 127
      %s680 = sand.u32 %s679, 85
      %s681 = sshrl.u32 %s680, 1
      %s682 = sor.u32 %s680, %s681
      %s683 = sand.u32 51, %s682
      %s684 = sshrl.u32 %s683, 2
      %s685 = sor.u32 %s683, %s684
      %s686 = sand.u32 15, %s685
      %v687 = vld [vmem:[%s677] sm:%s686]
      %v688 = vunpack.c.l.bf16 %v687
      %v689 = vunpack.c.h.bf16 %v687
      %v690 = vlaneseq
      %v691 = vand.u32 %v690, 127
      %vm693 = vcmp.lt.s32.totalorder %v691, 4
      %v694 = vsel %vm693, %v688, %v10
      %vm695 = vcmask 1046528
      %v696 = vsel %vm695, %v694, %v669
      %v697 = vrot.slane %v696, 7
      %s698 = scalar_lea.vmem [#allocation8], 88
      %v699 = vpack.c.bf16 0.0, %v697
      %701 = vst [vmem:[%s698] sm:$0xf] %v699
      %vm702 = vcmask 1046528
      %v703 = vsel %vm702, %v10, %v694
      %v704 = vrot.slane %v703, 7
      %s705 = scalar_lea.vmem [#allocation8], 92
      %v706 = vpack.c.bf16 0.0, %v704
      %708 = vst [vmem:[%s705] sm:$0xf] %v706
      %s709 = scalar_lea.vmem %s174, 64
      %s711 = sand.u32 0, 85
      %s712 = sshrl.u32 %s711, 1
      %s713 = sor.u32 %s711, %s712
      %s714 = sand.u32 51, %s713
      %s715 = sshrl.u32 %s714, 2
      %s716 = sor.u32 %s714, %s715
      %s717 = sand.u32 15, %s716
      %v718 = vld [vmem:[%s709] sm:%s717]
      %v719 = vunpack.c.l.bf16 %v718
      %v720 = vunpack.c.h.bf16 %v718
      %s721 = scalar_lea.vmem %s174, 68
      %s723 = sor.u32 255, 127
      %s724 = sand.u32 %s723, 85
      %s725 = sshrl.u32 %s724, 1
      %s726 = sor.u32 %s724, %s725
      %s727 = sand.u32 51, %s726
      %s728 = sshrl.u32 %s727, 2
      %s729 = sor.u32 %s727, %s728
      %s730 = sand.u32 15, %s729
      %v731 = vld [vmem:[%s721] sm:%s730]
      %v732 = vunpack.c.l.bf16 %v731
      %v733 = vunpack.c.h.bf16 %v731
      %v734 = vlaneseq
      %v735 = vand.u32 %v734, 127
      %vm737 = vcmp.lt.s32.totalorder %v735, 4
      %v738 = vsel %vm737, %v732, %v10
      %vm739 = vcmask 1046528
      %v740 = vsel %vm739, %v738, %v10
      %v741 = vrot.slane %v740, 7
      %s742 = scalar_lea.vmem [#allocation8], 96
      %v743 = vpack.c.bf16 0.0, %v741
      %745 = vst [vmem:[%s742] sm:$0xf] %v743
      %s746 = scalar_lea.vmem %s174, 72
      %s748 = sor.u32 255, 127
      %s749 = sand.u32 %s748, 85
      %s750 = sshrl.u32 %s749, 1
      %s751 = sor.u32 %s749, %s750
      %s752 = sand.u32 51, %s751
      %s753 = sshrl.u32 %s752, 2
      %s754 = sor.u32 %s752, %s753
      %s755 = sand.u32 15, %s754
      %v756 = vld [vmem:[%s746] sm:%s755]
      %v757 = vunpack.c.l.bf16 %v756
      %v758 = vunpack.c.h.bf16 %v756
      %v759 = vlaneseq
      %v760 = vand.u32 %v759, 127
      %vm762 = vcmp.lt.s32.totalorder %v760, 4
      %v763 = vsel %vm762, %v757, %v10
      %vm764 = vcmask 1046528
      %v765 = vsel %vm764, %v763, %v738
      %v766 = vrot.slane %v765, 7
      %s767 = scalar_lea.vmem [#allocation8], 100
      %v768 = vpack.c.bf16 0.0, %v766
      %770 = vst [vmem:[%s767] sm:$0xf] %v768
      %vm771 = vcmask 1046528
      %v772 = vsel %vm771, %v10, %v763
      %v773 = vrot.slane %v772, 7
      %s774 = scalar_lea.vmem [#allocation8], 104
      %v775 = vpack.c.bf16 0.0, %v773
      %777 = vst [vmem:[%s774] sm:$0xf] %v775
      %s778 = scalar_lea.vmem %s174, 72
      %s780 = sand.u32 0, 85
      %s781 = sshrl.u32 %s780, 1
      %s782 = sor.u32 %s780, %s781
      %s783 = sand.u32 51, %s782
      %s784 = sshrl.u32 %s783, 2
      %s785 = sor.u32 %s783, %s784
      %s786 = sand.u32 15, %s785
      %v787 = vld [vmem:[%s778] sm:%s786]
      %v788 = vunpack.c.l.bf16 %v787
      %v789 = vunpack.c.h.bf16 %v787
      %s790 = scalar_lea.vmem %s174, 76
      %s792 = sor.u32 255, 127
      %s793 = sand.u32 %s792, 85
      %s794 = sshrl.u32 %s793, 1
      %s795 = sor.u32 %s793, %s794
      %s796 = sand.u32 51, %s795
      %s797 = sshrl.u32 %s796, 2
      %s798 = sor.u32 %s796, %s797
      %s799 = sand.u32 15, %s798
      %v800 = vld [vmem:[%s790] sm:%s799]
      %v801 = vunpack.c.l.bf16 %v800
      %v802 = vunpack.c.h.bf16 %v800
      %v803 = vlaneseq
      %v804 = vand.u32 %v803, 127
      %vm806 = vcmp.lt.s32.totalorder %v804, 4
      %v807 = vsel %vm806, %v801, %v10
      %vm808 = vcmask 1046528
      %v809 = vsel %vm808, %v807, %v10
      %v810 = vrot.slane %v809, 7
      %s811 = scalar_lea.vmem [#allocation8], 108
      %v812 = vpack.c.bf16 0.0, %v810
      %814 = vst [vmem:[%s811] sm:$0xf] %v812
      %s815 = scalar_lea.vmem %s174, 80
      %s817 = sor.u32 255, 127
      %s818 = sand.u32 %s817, 85
      %s819 = sshrl.u32 %s818, 1
      %s820 = sor.u32 %s818, %s819
      %s821 = sand.u32 51, %s820
      %s822 = sshrl.u32 %s821, 2
      %s823 = sor.u32 %s821, %s822
      %s824 = sand.u32 15, %s823
      %v825 = vld [vmem:[%s815] sm:%s824]
      %v826 = vunpack.c.l.bf16 %v825
      %v827 = vunpack.c.h.bf16 %v825
      %v828 = vlaneseq
      %v829 = vand.u32 %v828, 127
      %vm831 = vcmp.lt.s32.totalorder %v829, 4
      %v832 = vsel %vm831, %v826, %v10
      %vm833 = vcmask 1046528
      %v834 = vsel %vm833, %v832, %v807
      %v835 = vrot.slane %v834, 7
      %s836 = scalar_lea.vmem [#allocation8], 112
      %v837 = vpack.c.bf16 0.0, %v835
      %839 = vst [vmem:[%s836] sm:$0xf] %v837
      %vm840 = vcmask 1046528
      %v841 = vsel %vm840, %v10, %v832
      %v842 = vrot.slane %v841, 7
      %s843 = scalar_lea.vmem [#allocation8], 116
      %v844 = vpack.c.bf16 0.0, %v842
      %846 = vst [vmem:[%s843] sm:$0xf] %v844
      %s847 = scalar_lea.vmem %s174, 80
      %s849 = sand.u32 0, 85
      %s850 = sshrl.u32 %s849, 1
      %s851 = sor.u32 %s849, %s850
      %s852 = sand.u32 51, %s851
      %s853 = sshrl.u32 %s852, 2
      %s854 = sor.u32 %s852, %s853
      %s855 = sand.u32 15, %s854
      %v856 = vld [vmem:[%s847] sm:%s855]
      %v857 = vunpack.c.l.bf16 %v856
      %v858 = vunpack.c.h.bf16 %v856
      %s859 = scalar_lea.vmem %s174, 84
      %s861 = sor.u32 255, 127
      %s862 = sand.u32 %s861, 85
      %s863 = sshrl.u32 %s862, 1
      %s864 = sor.u32 %s862, %s863
      %s865 = sand.u32 51, %s864
      %s866 = sshrl.u32 %s865, 2
      %s867 = sor.u32 %s865, %s866
      %s868 = sand.u32 15, %s867
      %v869 = vld [vmem:[%s859] sm:%s868]
      %v870 = vunpack.c.l.bf16 %v869
      %v871 = vunpack.c.h.bf16 %v869
      %v872 = vlaneseq
      %v873 = vand.u32 %v872, 127
      %vm875 = vcmp.lt.s32.totalorder %v873, 4
      %v876 = vsel %vm875, %v870, %v10
      %vm877 = vcmask 1046528
      %v878 = vsel %vm877, %v876, %v10
      %v879 = vrot.slane %v878, 7
      %s880 = scalar_lea.vmem [#allocation8], 120
      %v881 = vpack.c.bf16 0.0, %v879
      %883 = vst [vmem:[%s880] sm:$0xf] %v881
      %s884 = scalar_lea.vmem %s174, 88
      %s886 = sor.u32 255, 127
      %s887 = sand.u32 %s886, 85
      %s888 = sshrl.u32 %s887, 1
      %s889 = sor.u32 %s887, %s888
      %s890 = sand.u32 51, %s889
      %s891 = sshrl.u32 %s890, 2
      %s892 = sor.u32 %s890, %s891
      %s893 = sand.u32 15, %s892
      %v894 = vld [vmem:[%s884] sm:%s893]
      %v895 = vunpack.c.l.bf16 %v894
      %v896 = vunpack.c.h.bf16 %v894
      %v897 = vlaneseq
      %v898 = vand.u32 %v897, 127
      %vm900 = vcmp.lt.s32.totalorder %v898, 4
      %v901 = vsel %vm900, %v895, %v10
      %vm902 = vcmask 1046528
      %v903 = vsel %vm902, %v901, %v876
      %v904 = vrot.slane %v903, 7
      %s905 = scalar_lea.vmem [#allocation8], 124
      %v906 = vpack.c.bf16 0.0, %v904
      %908 = vst [vmem:[%s905] sm:$0xf] %v906
      %vm909 = vcmask 1046528
      %v910 = vsel %vm909, %v10, %v901
      %v911 = vrot.slane %v910, 7
      %s912 = scalar_lea.vmem [#allocation8], 128
      %v913 = vpack.c.bf16 0.0, %v911
      %915 = vst [vmem:[%s912] sm:$0xf] %v913
      %s916 = scalar_lea.vmem %s174, 88
      %s918 = sand.u32 0, 85
      %s919 = sshrl.u32 %s918, 1
      %s920 = sor.u32 %s918, %s919
      %s921 = sand.u32 51, %s920
      %s922 = sshrl.u32 %s921, 2
      %s923 = sor.u32 %s921, %s922
      %s924 = sand.u32 15, %s923
      %v925 = vld [vmem:[%s916] sm:%s924]
      %v926 = vunpack.c.l.bf16 %v925
      %v927 = vunpack.c.h.bf16 %v925
      %s928 = scalar_lea.vmem %s174, 92
      %s930 = sor.u32 255, 127
      %s931 = sand.u32 %s930, 85
      %s932 = sshrl.u32 %s931, 1
      %s933 = sor.u32 %s931, %s932
      %s934 = sand.u32 51, %s933
      %s935 = sshrl.u32 %s934, 2
      %s936 = sor.u32 %s934, %s935
      %s937 = sand.u32 15, %s936
      %v938 = vld [vmem:[%s928] sm:%s937]
      %v939 = vunpack.c.l.bf16 %v938
      %v940 = vunpack.c.h.bf16 %v938
      %v941 = vlaneseq
      %v942 = vand.u32 %v941, 127
      %vm944 = vcmp.lt.s32.totalorder %v942, 4
      %v945 = vsel %vm944, %v939, %v10
      %vm946 = vcmask 1046528
      %v947 = vsel %vm946, %v945, %v10
      %v948 = vrot.slane %v947, 7
      %s949 = scalar_lea.vmem [#allocation8], 132
      %v950 = vpack.c.bf16 0.0, %v948
      %952 = vst [vmem:[%s949] sm:$0xf] %v950
      %s953 = scalar_lea.vmem %s174, 96
      %s955 = sor.u32 255, 127
      %s956 = sand.u32 %s955, 85
      %s957 = sshrl.u32 %s956, 1
      %s958 = sor.u32 %s956, %s957
      %s959 = sand.u32 51, %s958
      %s960 = sshrl.u32 %s959, 2
      %s961 = sor.u32 %s959, %s960
      %s962 = sand.u32 15, %s961
      %v963 = vld [vmem:[%s953] sm:%s962]
      %v964 = vunpack.c.l.bf16 %v963
      %v965 = vunpack.c.h.bf16 %v963
      %v966 = vlaneseq
      %v967 = vand.u32 %v966, 127
      %vm969 = vcmp.lt.s32.totalorder %v967, 4
      %v970 = vsel %vm969, %v964, %v10
      %vm971 = vcmask 1046528
      %v972 = vsel %vm971, %v970, %v945
      %v973 = vrot.slane %v972, 7
      %s974 = scalar_lea.vmem [#allocation8], 136
      %v975 = vpack.c.bf16 0.0, %v973
      %977 = vst [vmem:[%s974] sm:$0xf] %v975
      %vm978 = vcmask 1046528
      %v979 = vsel %vm978, %v10, %v970
      %v980 = vrot.slane %v979, 7
      %s981 = scalar_lea.vmem [#allocation8], 140
      %v982 = vpack.c.bf16 0.0, %v980
      %984 = vst [vmem:[%s981] sm:$0xf] %v982
      %s985 = scalar_lea.vmem %s174, 96
      %s987 = sand.u32 0, 85
      %s988 = sshrl.u32 %s987, 1
      %s989 = sor.u32 %s987, %s988
      %s990 = sand.u32 51, %s989
      %s991 = sshrl.u32 %s990, 2
      %s992 = sor.u32 %s990, %s991
      %s993 = sand.u32 15, %s992
      %v994 = vld [vmem:[%s985] sm:%s993]
      %v995 = vunpack.c.l.bf16 %v994
      %v996 = vunpack.c.h.bf16 %v994
      %s997 = scalar_lea.vmem %s174, 100
      %s999 = sor.u32 255, 127
      %s1000 = sand.u32 %s999, 85
      %s1001 = sshrl.u32 %s1000, 1
      %s1002 = sor.u32 %s1000, %s1001
      %s1003 = sand.u32 51, %s1002
      %s1004 = sshrl.u32 %s1003, 2
      %s1005 = sor.u32 %s1003, %s1004
      %s1006 = sand.u32 15, %s1005
      %v1007 = vld [vmem:[%s997] sm:%s1006]
      %v1008 = vunpack.c.l.bf16 %v1007
      %v1009 = vunpack.c.h.bf16 %v1007
      %v1010 = vlaneseq
      %v1011 = vand.u32 %v1010, 127
      %vm1013 = vcmp.lt.s32.totalorder %v1011, 4
      %v1014 = vsel %vm1013, %v1008, %v10
      %vm1015 = vcmask 1046528
      %v1016 = vsel %vm1015, %v1014, %v10
      %v1017 = vrot.slane %v1016, 7
      %s1018 = scalar_lea.vmem [#allocation8], 144
      %v1019 = vpack.c.bf16 0.0, %v1017
      %1021 = vst [vmem:[%s1018] sm:$0xf] %v1019
      %s1022 = scalar_lea.vmem %s174, 104
      %s1024 = sor.u32 255, 127
      %s1025 = sand.u32 %s1024, 85
      %s1026 = sshrl.u32 %s1025, 1
      %s1027 = sor.u32 %s1025, %s1026
      %s1028 = sand.u32 51, %s1027
      %s1029 = sshrl.u32 %s1028, 2
      %s1030 = sor.u32 %s1028, %s1029
      %s1031 = sand.u32 15, %s1030
      %v1032 = vld [vmem:[%s1022] sm:%s1031]
      %v1033 = vunpack.c.l.bf16 %v1032
      %v1034 = vunpack.c.h.bf16 %v1032
      %v1035 = vlaneseq
      %v1036 = vand.u32 %v1035, 127
      %vm1038 = vcmp.lt.s32.totalorder %v1036, 4
      %v1039 = vsel %vm1038, %v1033, %v10
      %vm1040 = vcmask 1046528
      %v1041 = vsel %vm1040, %v1039, %v1014
      %v1042 = vrot.slane %v1041, 7
      %s1043 = scalar_lea.vmem [#allocation8], 148
      %v1044 = vpack.c.bf16 0.0, %v1042
      %1046 = vst [vmem:[%s1043] sm:$0xf] %v1044
      %vm1047 = vcmask 1046528
      %v1048 = vsel %vm1047, %v10, %v1039
      %v1049 = vrot.slane %v1048, 7
      %s1050 = scalar_lea.vmem [#allocation8], 152
      %v1051 = vpack.c.bf16 0.0, %v1049
      %1053 = vst [vmem:[%s1050] sm:$0xf] %v1051
      %s1054 = scalar_lea.vmem %s174, 104
      %s1056 = sand.u32 0, 85
      %s1057 = sshrl.u32 %s1056, 1
      %s1058 = sor.u32 %s1056, %s1057
      %s1059 = sand.u32 51, %s1058
      %s1060 = sshrl.u32 %s1059, 2
      %s1061 = sor.u32 %s1059, %s1060
      %s1062 = sand.u32 15, %s1061
      %v1063 = vld [vmem:[%s1054] sm:%s1062]
      %v1064 = vunpack.c.l.bf16 %v1063
      %v1065 = vunpack.c.h.bf16 %v1063
      %s1066 = scalar_lea.vmem %s174, 108
      %s1068 = sor.u32 255, 127
      %s1069 = sand.u32 %s1068, 85
      %s1070 = sshrl.u32 %s1069, 1
      %s1071 = sor.u32 %s1069, %s1070
      %s1072 = sand.u32 51, %s1071
      %s1073 = sshrl.u32 %s1072, 2
      %s1074 = sor.u32 %s1072, %s1073
      %s1075 = sand.u32 15, %s1074
      %v1076 = vld [vmem:[%s1066] sm:%s1075]
      %v1077 = vunpack.c.l.bf16 %v1076
      %v1078 = vunpack.c.h.bf16 %v1076
      %v1079 = vlaneseq
      %v1080 = vand.u32 %v1079, 127
      %vm1082 = vcmp.lt.s32.totalorder %v1080, 4
      %v1083 = vsel %vm1082, %v1077, %v10
      %vm1084 = vcmask 1046528
      %v1085 = vsel %vm1084, %v1083, %v10
      %v1086 = vrot.slane %v1085, 7
      %s1087 = scalar_lea.vmem [#allocation8], 156
      %v1088 = vpack.c.bf16 0.0, %v1086
      %1090 = vst [vmem:[%s1087] sm:$0xf] %v1088
      %s1091 = scalar_lea.vmem %s174, 112
      %s1093 = sor.u32 255, 127
      %s1094 = sand.u32 %s1093, 85
      %s1095 = sshrl.u32 %s1094, 1
      %s1096 = sor.u32 %s1094, %s1095
      %s1097 = sand.u32 51, %s1096
      %s1098 = sshrl.u32 %s1097, 2
      %s1099 = sor.u32 %s1097, %s1098
      %s1100 = sand.u32 15, %s1099
      %v1101 = vld [vmem:[%s1091] sm:%s1100]
      %v1102 = vunpack.c.l.bf16 %v1101
      %v1103 = vunpack.c.h.bf16 %v1101
      %v1104 = vlaneseq
      %v1105 = vand.u32 %v1104, 127
      %vm1107 = vcmp.lt.s32.totalorder %v1105, 4
      %v1108 = vsel %vm1107, %v1102, %v10
      %vm1109 = vcmask 1046528
      %v1110 = vsel %vm1109, %v1108, %v1083
      %v1111 = vrot.slane %v1110, 7
      %s1112 = scalar_lea.vmem [#allocation8], 160
      %v1113 = vpack.c.bf16 0.0, %v1111
      %1115 = vst [vmem:[%s1112] sm:$0xf] %v1113
      %vm1116 = vcmask 1046528
      %v1117 = vsel %vm1116, %v10, %v1108
      %v1118 = vrot.slane %v1117, 7
      %s1119 = scalar_lea.vmem [#allocation8], 164
      %v1120 = vpack.c.bf16 0.0, %v1118
      %1122 = vst [vmem:[%s1119] sm:$0xf] %v1120
      %s1123 = scalar_lea.vmem %s174, 112
      %s1125 = sand.u32 0, 85
      %s1126 = sshrl.u32 %s1125, 1
      %s1127 = sor.u32 %s1125, %s1126
      %s1128 = sand.u32 51, %s1127
      %s1129 = sshrl.u32 %s1128, 2
      %s1130 = sor.u32 %s1128, %s1129
      %s1131 = sand.u32 15, %s1130
      %v1132 = vld [vmem:[%s1123] sm:%s1131]
      %v1133 = vunpack.c.l.bf16 %v1132
      %v1134 = vunpack.c.h.bf16 %v1132
      %s1135 = scalar_lea.vmem %s174, 116
      %s1137 = sor.u32 255, 127
      %s1138 = sand.u32 %s1137, 85
      %s1139 = sshrl.u32 %s1138, 1
      %s1140 = sor.u32 %s1138, %s1139
      %s1141 = sand.u32 51, %s1140
      %s1142 = sshrl.u32 %s1141, 2
      %s1143 = sor.u32 %s1141, %s1142
      %s1144 = sand.u32 15, %s1143
      %v1145 = vld [vmem:[%s1135] sm:%s1144]
      %v1146 = vunpack.c.l.bf16 %v1145
      %v1147 = vunpack.c.h.bf16 %v1145
      %v1148 = vlaneseq
      %v1149 = vand.u32 %v1148, 127
      %vm1151 = vcmp.lt.s32.totalorder %v1149, 4
      %v1152 = vsel %vm1151, %v1146, %v10
      %vm1153 = vcmask 1046528
      %v1154 = vsel %vm1153, %v1152, %v10
      %v1155 = vrot.slane %v1154, 7
      %s1156 = scalar_lea.vmem [#allocation8], 168
      %v1157 = vpack.c.bf16 0.0, %v1155
      %1159 = vst [vmem:[%s1156] sm:$0xf] %v1157
      %s1160 = scalar_lea.vmem %s174, 120
      %s1162 = sor.u32 255, 127
      %s1163 = sand.u32 %s1162, 85
      %s1164 = sshrl.u32 %s1163, 1
      %s1165 = sor.u32 %s1163, %s1164
      %s1166 = sand.u32 51, %s1165
      %s1167 = sshrl.u32 %s1166, 2
      %s1168 = sor.u32 %s1166, %s1167
      %s1169 = sand.u32 15, %s1168
      %v1170 = vld [vmem:[%s1160] sm:%s1169]
      %v1171 = vunpack.c.l.bf16 %v1170
      %v1172 = vunpack.c.h.bf16 %v1170
      %v1173 = vlaneseq
      %v1174 = vand.u32 %v1173, 127
      %vm1176 = vcmp.lt.s32.totalorder %v1174, 4
      %v1177 = vsel %vm1176, %v1171, %v10
      %vm1178 = vcmask 1046528
      %v1179 = vsel %vm1178, %v1177, %v1152
      %v1180 = vrot.slane %v1179, 7
      %s1181 = scalar_lea.vmem [#allocation8], 172
      %v1182 = vpack.c.bf16 0.0, %v1180
      %1184 = vst [vmem:[%s1181] sm:$0xf] %v1182
      %vm1185 = vcmask 1046528
      %v1186 = vsel %vm1185, %v10, %v1177
      %v1187 = vrot.slane %v1186, 7
      %s1188 = scalar_lea.vmem [#allocation8], 176
      %v1189 = vpack.c.bf16 0.0, %v1187
      %1191 = vst [vmem:[%s1188] sm:$0xf] %v1189
      %s1192 = scalar_lea.vmem %s174, 120
      %s1194 = sand.u32 0, 85
      %s1195 = sshrl.u32 %s1194, 1
      %s1196 = sor.u32 %s1194, %s1195
      %s1197 = sand.u32 51, %s1196
      %s1198 = sshrl.u32 %s1197, 2
      %s1199 = sor.u32 %s1197, %s1198
      %s1200 = sand.u32 15, %s1199
      %v1201 = vld [vmem:[%s1192] sm:%s1200]
      %v1202 = vunpack.c.l.bf16 %v1201
      %v1203 = vunpack.c.h.bf16 %v1201
      %s1204 = scalar_lea.vmem %s174, 124
      %s1206 = sor.u32 255, 127
      %s1207 = sand.u32 %s1206, 85
      %s1208 = sshrl.u32 %s1207, 1
      %s1209 = sor.u32 %s1207, %s1208
      %s1210 = sand.u32 51, %s1209
      %s1211 = sshrl.u32 %s1210, 2
      %s1212 = sor.u32 %s1210, %s1211
      %s1213 = sand.u32 15, %s1212
      %v1214 = vld [vmem:[%s1204] sm:%s1213]
      %v1215 = vunpack.c.l.bf16 %v1214
      %v1216 = vunpack.c.h.bf16 %v1214
      %v1217 = vlaneseq
      %v1218 = vand.u32 %v1217, 127
      %vm1220 = vcmp.lt.s32.totalorder %v1218, 4
      %v1221 = vsel %vm1220, %v1215, %v10
      %vm1222 = vcmask 1046528
      %v1223 = vsel %vm1222, %v1221, %v10
      %v1224 = vrot.slane %v1223, 7
      %s1225 = scalar_lea.vmem [#allocation8], 180
      %v1226 = vpack.c.bf16 0.0, %v1224
      %1228 = vst [vmem:[%s1225] sm:$0xf] %v1226
      %s1229 = scalar_lea.vmem %s174, 128
      %s1231 = sor.u32 255, 127
      %s1232 = sand.u32 %s1231, 85
      %s1233 = sshrl.u32 %s1232, 1
      %s1234 = sor.u32 %s1232, %s1233
      %s1235 = sand.u32 51, %s1234
      %s1236 = sshrl.u32 %s1235, 2
      %s1237 = sor.u32 %s1235, %s1236
      %s1238 = sand.u32 15, %s1237
      %v1239 = vld [vmem:[%s1229] sm:%s1238]
      %v1240 = vunpack.c.l.bf16 %v1239
      %v1241 = vunpack.c.h.bf16 %v1239
      %v1242 = vlaneseq
      %v1243 = vand.u32 %v1242, 127
      %vm1245 = vcmp.lt.s32.totalorder %v1243, 4
      %v1246 = vsel %vm1245, %v1240, %v10
      %vm1247 = vcmask 1046528
      %v1248 = vsel %vm1247, %v1246, %v1221
      %v1249 = vrot.slane %v1248, 7
      %s1250 = scalar_lea.vmem [#allocation8], 184
      %v1251 = vpack.c.bf16 0.0, %v1249
      %1253 = vst [vmem:[%s1250] sm:$0xf] %v1251
      %vm1254 = vcmask 1046528
      %v1255 = vsel %vm1254, %v10, %v1246
      %v1256 = vrot.slane %v1255, 7
      %s1257 = scalar_lea.vmem [#allocation8], 188
      %v1258 = vpack.c.bf16 0.0, %v1256
      %1260 = vst [vmem:[%s1257] sm:$0xf] %v1258
      %s1261 = scalar_lea.vmem %s174, 128
      %s1263 = sand.u32 0, 85
      %s1264 = sshrl.u32 %s1263, 1
      %s1265 = sor.u32 %s1263, %s1264
      %s1266 = sand.u32 51, %s1265
      %s1267 = sshrl.u32 %s1266, 2
      %s1268 = sor.u32 %s1266, %s1267
      %s1269 = sand.u32 15, %s1268
      %v1270 = vld [vmem:[%s1261] sm:%s1269]
      %v1271 = vunpack.c.l.bf16 %v1270
      %v1272 = vunpack.c.h.bf16 %v1270
      %s1273 = scalar_lea.vmem %s174, 132
      %s1275 = sor.u32 255, 127
      %s1276 = sand.u32 %s1275, 85
      %s1277 = sshrl.u32 %s1276, 1
      %s1278 = sor.u32 %s1276, %s1277
      %s1279 = sand.u32 51, %s1278
      %s1280 = sshrl.u32 %s1279, 2
      %s1281 = sor.u32 %s1279, %s1280
      %s1282 = sand.u32 15, %s1281
      %v1283 = vld [vmem:[%s1273] sm:%s1282]
      %v1284 = vunpack.c.l.bf16 %v1283
      %v1285 = vunpack.c.h.bf16 %v1283
      %v1286 = vlaneseq
      %v1287 = vand.u32 %v1286, 127
      %vm1289 = vcmp.lt.s32.totalorder %v1287, 4
      %v1290 = vsel %vm1289, %v1284, %v10
      %vm1291 = vcmask 1046528
      %v1292 = vsel %vm1291, %v1290, %v10
      %v1293 = vrot.slane %v1292, 7
      %s1294 = scalar_lea.vmem [#allocation8], 192
      %v1295 = vpack.c.bf16 0.0, %v1293
      %1297 = vst [vmem:[%s1294] sm:$0xf] %v1295
      %s1298 = scalar_lea.vmem %s174, 136
      %s1300 = sor.u32 255, 127
      %s1301 = sand.u32 %s1300, 85
      %s1302 = sshrl.u32 %s1301, 1
      %s1303 = sor.u32 %s1301, %s1302
      %s1304 = sand.u32 51, %s1303
      %s1305 = sshrl.u32 %s1304, 2
      %s1306 = sor.u32 %s1304, %s1305
      %s1307 = sand.u32 15, %s1306
      %v1308 = vld [vmem:[%s1298] sm:%s1307]
      %v1309 = vunpack.c.l.bf16 %v1308
      %v1310 = vunpack.c.h.bf16 %v1308
      %v1311 = vlaneseq
      %v1312 = vand.u32 %v1311, 127
      %vm1314 = vcmp.lt.s32.totalorder %v1312, 4
      %v1315 = vsel %vm1314, %v1309, %v10
      %vm1316 = vcmask 1046528
      %v1317 = vsel %vm1316, %v1315, %v1290
      %v1318 = vrot.slane %v1317, 7
      %s1319 = scalar_lea.vmem [#allocation8], 196
      %v1320 = vpack.c.bf16 0.0, %v1318
      %1322 = vst [vmem:[%s1319] sm:$0xf] %v1320
      %vm1323 = vcmask 1046528
      %v1324 = vsel %vm1323, %v10, %v1315
      %v1325 = vrot.slane %v1324, 7
      %s1326 = scalar_lea.vmem [#allocation8], 200
      %v1327 = vpack.c.bf16 0.0, %v1325
      %1329 = vst [vmem:[%s1326] sm:$0xf] %v1327
      %s1330 = scalar_lea.vmem [#allocation8], 204
      %v1331 = vpack.c.bf16 0.0, %v10
      %1333 = vst [vmem:[%s1330] sm:$0xf] %v1331
      %s1334 = scalar_lea.vmem [#allocation8], 208
      %v1335 = vpack.c.bf16 0.0, %v10
      %1337 = vst [vmem:[%s1334] sm:$0xf] %v1335
      %s1338 = scalar_lea.vmem [#allocation8], 212
      %v1339 = vpack.c.bf16 0.0, %v10
      %1341 = vst [vmem:[%s1338] sm:$0xf] %v1339
      %v1343 = vld [vmem:[%s0] sm:$0xf]
      %v1344 = vld [vmem:[%s1] sm:$0xff]
      %v1345 = vld [vmem:[#allocation8] sm:$0xf]
      %v1346 = vld [vmem:[#allocation8 + $0x4] sm:$0xf]
      %v1347 = vld [vmem:[#allocation8 + $0x8] sm:$0x1]
      %v1348 = vld [vmem:[#allocation8 + $0xc] sm:$0xf]
      %v1349 = vld [vmem:[#allocation8 + $0x10] sm:$0xf]
      %v1350 = vld [vmem:[#allocation8 + $0x14] sm:$0x1]
      %v1351 = vld [vmem:[#allocation8 + $0x18] sm:$0xf]
      %v1352 = vld [vmem:[#allocation8 + $0x1c] sm:$0xf]
      %v1353 = vld [vmem:[#allocation8 + $0x20] sm:$0x1]
      %v1354 = vld [vmem:[#allocation8 + $0x24] sm:$0xf]
      %v1355 = vld [vmem:[#allocation8 + $0x28] sm:$0xf]
      %v1356 = vld [vmem:[#allocation8 + $0x2c] sm:$0x1]
      %v1357 = vld [vmem:[#allocation8 + $0x30] sm:$0xf]
      %v1358 = vld [vmem:[#allocation8 + $0x34] sm:$0xf]
      %v1359 = vld [vmem:[#allocation8 + $0x38] sm:$0x1]
      %v1360 = vld [vmem:[#allocation8 + $0x3c] sm:$0xf]
      %v1361 = vld [vmem:[#allocation8 + $0x40] sm:$0xf]
      %v1362 = vld [vmem:[#allocation8 + $0x44] sm:$0x1]
      %v1363 = vld [vmem:[#allocation8 + $0x48] sm:$0xf]
      %v1364 = vld [vmem:[#allocation8 + $0x4c] sm:$0xf]
      %v1365 = vld [vmem:[#allocation8 + $0x50] sm:$0x1]
      %v1366 = vld [vmem:[#allocation8 + $0x54] sm:$0xf]
      %v1367 = vld [vmem:[#allocation8 + $0x58] sm:$0xf]
      %v1368 = vld [vmem:[#allocation8 + $0x5c] sm:$0x1]
      %v1369 = vld [vmem:[#allocation8 + $0x60] sm:$0xf]
      %v1370 = vld [vmem:[#allocation8 + $0x64] sm:$0xf]
      %v1371 = vld [vmem:[#allocation8 + $0x68] sm:$0x1]
      %v1372 = vld [vmem:[#allocation8 + $0x6c] sm:$0xf]
      %v1373 = vld [vmem:[#allocation8 + $0x70] sm:$0xf]
      %v1374 = vld [vmem:[#allocation8 + $0x74] sm:$0x1]
      %v1375 = vld [vmem:[#allocation8 + $0x78] sm:$0xf]
      %v1376 = vld [vmem:[#allocation8 + $0x7c] sm:$0xf]
      %v1377 = vld [vmem:[#allocation8 + $0x80] sm:$0x1]
      %v1378 = vld [vmem:[#allocation8 + $0x84] sm:$0xf]
      %v1379 = vld [vmem:[#allocation8 + $0x88] sm:$0xf]
      %v1380 = vld [vmem:[#allocation8 + $0x8c] sm:$0x1]
      %v1381 = vld [vmem:[#allocation8 + $0x90] sm:$0xf]
      %v1382 = vld [vmem:[#allocation8 + $0x94] sm:$0xf]
      %v1383 = vld [vmem:[#allocation8 + $0x98] sm:$0x1]
      %v1384 = vld [vmem:[#allocation8 + $0x9c] sm:$0xf]
      %v1385 = vld [vmem:[#allocation8 + $0xa0] sm:$0xf]
      %v1386 = vld [vmem:[#allocation8 + $0xa4] sm:$0x1]
      %v1387 = vld [vmem:[#allocation8 + $0xa8] sm:$0xf]
      %v1388 = vld [vmem:[#allocation8 + $0xac] sm:$0xf]
      %v1389 = vld [vmem:[#allocation8 + $0xb0] sm:$0x1]
      %v1390 = vld [vmem:[#allocation8 + $0xb4] sm:$0xf]
      %v1391 = vld [vmem:[#allocation8 + $0xb8] sm:$0xf]
      %v1392 = vld [vmem:[#allocation8 + $0xbc] sm:$0x1]
      %v1393 = vld [vmem:[#allocation8 + $0xc0] sm:$0xf]
      %v1394 = vld [vmem:[#allocation8 + $0xc4] sm:$0xf]
      %v1395 = vld [vmem:[#allocation8 + $0xc8] sm:$0x1]
      %v1396 = vld [vmem:[#allocation8 + $0xcc] sm:$0xf]
      %v1397 = vld [vmem:[#allocation8 + $0xd0] sm:$0xf]
      %v1398 = vld [vmem:[#allocation8 + $0xd4] sm:$0x1]
      %v1399 = vunpack.c.l.bf16 %v1345
      %v1400 = vunpack.c.l.bf16 %v1346
      %v1401 = vunpack.c.l.bf16 %v1347
      %v1402 = vunpack.c.l.bf16 %v1348
      %v1403 = vunpack.c.l.bf16 %v1349
      %v1404 = vunpack.c.l.bf16 %v1350
      %v1405 = vunpack.c.l.bf16 %v1351
      %v1406 = vunpack.c.l.bf16 %v1352
      %v1407 = vunpack.c.l.bf16 %v1353
      %v1408 = vunpack.c.l.bf16 %v1354
      %v1409 = vunpack.c.l.bf16 %v1355
      %v1410 = vunpack.c.l.bf16 %v1356
      %v1411 = vunpack.c.l.bf16 %v1357
      %v1412 = vunpack.c.l.bf16 %v1358
      %v1413 = vunpack.c.l.bf16 %v1359
      %v1414 = vunpack.c.l.bf16 %v1360
      %v1415 = vunpack.c.l.bf16 %v1361
      %v1416 = vunpack.c.l.bf16 %v1362
      %v1417 = vunpack.c.l.bf16 %v1363
      %v1418 = vunpack.c.l.bf16 %v1364
      %v1419 = vunpack.c.l.bf16 %v1365
      %v1420 = vunpack.c.l.bf16 %v1366
      %v1421 = vunpack.c.l.bf16 %v1367
      %v1422 = vunpack.c.l.bf16 %v1368
      %v1423 = vunpack.c.l.bf16 %v1369
      %v1424 = vunpack.c.l.bf16 %v1370
      %v1425 = vunpack.c.l.bf16 %v1371
      %v1426 = vunpack.c.l.bf16 %v1372
      %v1427 = vunpack.c.l.bf16 %v1373
      %v1428 = vunpack.c.l.bf16 %v1374
      %v1429 = vunpack.c.l.bf16 %v1375
      %v1430 = vunpack.c.l.bf16 %v1376
      %v1431 = vunpack.c.l.bf16 %v1377
      %v1432 = vunpack.c.l.bf16 %v1378
      %v1433 = vunpack.c.l.bf16 %v1379
      %v1434 = vunpack.c.l.bf16 %v1380
      %v1435 = vunpack.c.l.bf16 %v1381
      %v1436 = vunpack.c.l.bf16 %v1382
      %v1437 = vunpack.c.l.bf16 %v1383
      %v1438 = vunpack.c.l.bf16 %v1384
      %v1439 = vunpack.c.l.bf16 %v1385
      %v1440 = vunpack.c.l.bf16 %v1386
      %v1441 = vunpack.c.l.bf16 %v1387
      %v1442 = vunpack.c.l.bf16 %v1388
      %v1443 = vunpack.c.l.bf16 %v1389
      %v1444 = vunpack.c.l.bf16 %v1390
      %v1445 = vunpack.c.l.bf16 %v1391
      %v1446 = vunpack.c.l.bf16 %v1392
      %v1447 = vunpack.c.l.bf16 %v1393
      %v1448 = vunpack.c.l.bf16 %v1394
      %v1449 = vunpack.c.l.bf16 %v1395
      %v1450 = vunpack.c.l.bf16 %v1396
      %v1451 = vunpack.c.l.bf16 %v1397
      %v1452 = vunpack.c.l.bf16 %v1398
      %vm1453 = vcmask 31744
      %1454 = vst.msk [vmem:[#allocation2] sm:$0xff] %vm1453, %v1399
      %1455 = vst.msk [vmem:[#allocation2 + $0x8] sm:$0xff] %vm1453, %v1400
      %1456 = vst.msk [vmem:[#allocation2 + $0x10] sm:$0xff] %vm1453, %v1402
      %1457 = vst.msk [vmem:[#allocation2 + $0x18] sm:$0xff] %vm1453, %v1403
      %1458 = vst.msk [vmem:[#allocation2 + $0x20] sm:$0xff] %vm1453, %v1405
      %1459 = vst.msk [vmem:[#allocation2 + $0x28] sm:$0xff] %vm1453, %v1406
      %1460 = vst.msk [vmem:[#allocation2 + $0x30] sm:$0xff] %vm1453, %v1408
      %1461 = vst.msk [vmem:[#allocation2 + $0x38] sm:$0xff] %vm1453, %v1409
      %1462 = vst.msk [vmem:[#allocation2 + $0x40] sm:$0xff] %vm1453, %v1411
      %1463 = vst.msk [vmem:[#allocation2 + $0x48] sm:$0xff] %vm1453, %v1412
      %1464 = vst.msk [vmem:[#allocation2 + $0x50] sm:$0xff] %vm1453, %v1414
      %1465 = vst.msk [vmem:[#allocation2 + $0x58] sm:$0xff] %vm1453, %v1415
      %1466 = vst.msk [vmem:[#allocation2 + $0x60] sm:$0xff] %vm1453, %v1417
      %1467 = vst.msk [vmem:[#allocation2 + $0x68] sm:$0xff] %vm1453, %v1418
      %1468 = vst.msk [vmem:[#allocation2 + $0x70] sm:$0xff] %vm1453, %v1420
      %1469 = vst.msk [vmem:[#allocation2 + $0x78] sm:$0xff] %vm1453, %v1421
      %1470 = vst.msk [vmem:[#allocation2 + $0x80] sm:$0xff] %vm1453, %v1423
      %1471 = vst.msk [vmem:[#allocation2 + $0x88] sm:$0xff] %vm1453, %v1424
      %1472 = vst.msk [vmem:[#allocation2 + $0x90] sm:$0xff] %vm1453, %v1426
      %1473 = vst.msk [vmem:[#allocation2 + $0x98] sm:$0xff] %vm1453, %v1427
      %1474 = vst.msk [vmem:[#allocation2 + $0xa0] sm:$0xff] %vm1453, %v1429
      %1475 = vst.msk [vmem:[#allocation2 + $0xa8] sm:$0xff] %vm1453, %v1430
      %1476 = vst.msk [vmem:[#allocation2 + $0xb0] sm:$0xff] %vm1453, %v1432
      %1477 = vst.msk [vmem:[#allocation2 + $0xb8] sm:$0xff] %vm1453, %v1433
      %1478 = vst.msk [vmem:[#allocation2 + $0xc0] sm:$0xff] %vm1453, %v1435
      %1479 = vst.msk [vmem:[#allocation2 + $0xc8] sm:$0xff] %vm1453, %v1436
      %1480 = vst.msk [vmem:[#allocation2 + $0xd0] sm:$0xff] %vm1453, %v1438
      %1481 = vst.msk [vmem:[#allocation2 + $0xd8] sm:$0xff] %vm1453, %v1439
      %1482 = vst.msk [vmem:[#allocation2 + $0xe0] sm:$0xff] %vm1453, %v1441
      %1483 = vst.msk [vmem:[#allocation2 + $0xe8] sm:$0xff] %vm1453, %v1442
      %1484 = vst.msk [vmem:[#allocation2 + $0xf0] sm:$0xff] %vm1453, %v1444
      %1485 = vst.msk [vmem:[#allocation2 + $0xf8] sm:$0xff] %vm1453, %v1445
      %vm1534 = vcmask 1046528
      %v1535 = vrot.slane %v1399, 1
      %v1536 = vrot.slane %v1400, 1
      %v1537 = vsel %vm1534, %v1535, %v1536
      %v1538 = vrot.slane %v1401, 1
      %v1539 = vsel %vm1534, %v1536, %v1538
      %v1540 = vrot.slane %v1402, 1
      %v1541 = vrot.slane %v1403, 1
      %v1542 = vsel %vm1534, %v1540, %v1541
      %v1543 = vrot.slane %v1404, 1
      %v1544 = vsel %vm1534, %v1541, %v1543
      %v1545 = vrot.slane %v1405, 1
      %v1546 = vrot.slane %v1406, 1
      %v1547 = vsel %vm1534, %v1545, %v1546
      %v1548 = vrot.slane %v1407, 1
      %v1549 = vsel %vm1534, %v1546, %v1548
      %v1550 = vrot.slane %v1408, 1
      %v1551 = vrot.slane %v1409, 1
      %v1552 = vsel %vm1534, %v1550, %v1551
      %v1553 = vrot.slane %v1410, 1
      %v1554 = vsel %vm1534, %v1551, %v1553
      %v1555 = vrot.slane %v1411, 1
      %v1556 = vrot.slane %v1412, 1
      %v1557 = vsel %vm1534, %v1555, %v1556
      %v1558 = vrot.slane %v1413, 1
      %v1559 = vsel %vm1534, %v1556, %v1558
      %v1560 = vrot.slane %v1414, 1
      %v1561 = vrot.slane %v1415, 1
      %v1562 = vsel %vm1534, %v1560, %v1561
      %v1563 = vrot.slane %v1416, 1
      %v1564 = vsel %vm1534, %v1561, %v1563
      %v1565 = vrot.slane %v1417, 1
      %v1566 = vrot.slane %v1418, 1
      %v1567 = vsel %vm1534, %v1565, %v1566
      %v1568 = vrot.slane %v1419, 1
      %v1569 = vsel %vm1534, %v1566, %v1568
      %v1570 = vrot.slane %v1420, 1
      %v1571 = vrot.slane %v1421, 1
      %v1572 = vsel %vm1534, %v1570, %v1571
      %v1573 = vrot.slane %v1422, 1
      %v1574 = vsel %vm1534, %v1571, %v1573
      %v1575 = vrot.slane %v1423, 1
      %v1576 = vrot.slane %v1424, 1
      %v1577 = vsel %vm1534, %v1575, %v1576
      %v1578 = vrot.slane %v1425, 1
      %v1579 = vsel %vm1534, %v1576, %v1578
      %v1580 = vrot.slane %v1426, 1
      %v1581 = vrot.slane %v1427, 1
      %v1582 = vsel %vm1534, %v1580, %v1581
      %v1583 = vrot.slane %v1428, 1
      %v1584 = vsel %vm1534, %v1581, %v1583
      %v1585 = vrot.slane %v1429, 1
      %v1586 = vrot.slane %v1430, 1
      %v1587 = vsel %vm1534, %v1585, %v1586
      %v1588 = vrot.slane %v1431, 1
      %v1589 = vsel %vm1534, %v1586, %v1588
      %v1590 = vrot.slane %v1432, 1
      %v1591 = vrot.slane %v1433, 1
      %v1592 = vsel %vm1534, %v1590, %v1591
      %v1593 = vrot.slane %v1434, 1
      %v1594 = vsel %vm1534, %v1591, %v1593
      %v1595 = vrot.slane %v1435, 1
      %v1596 = vrot.slane %v1436, 1
      %v1597 = vsel %vm1534, %v1595, %v1596
      %v1598 = vrot.slane %v1437, 1
      %v1599 = vsel %vm1534, %v1596, %v1598
      %v1600 = vrot.slane %v1438, 1
      %v1601 = vrot.slane %v1439, 1
      %v1602 = vsel %vm1534, %v1600, %v1601
      %v1603 = vrot.slane %v1440, 1
      %v1604 = vsel %vm1534, %v1601, %v1603
      %v1605 = vrot.slane %v1441, 1
      %v1606 = vrot.slane %v1442, 1
      %v1607 = vsel %vm1534, %v1605, %v1606
      %v1608 = vrot.slane %v1443, 1
      %v1609 = vsel %vm1534, %v1606, %v1608
      %v1610 = vrot.slane %v1444, 1
      %v1611 = vrot.slane %v1445, 1
      %v1612 = vsel %vm1534, %v1610, %v1611
      %v1613 = vrot.slane %v1446, 1
      %v1614 = vsel %vm1534, %v1611, %v1613
      %1615 = vrot.lane.b32.xlu0 %v1537, 4
      %v1616 = vpop.permute.xlu0 %1615
      %1617 = vrot.lane.b32.xlu0 %v1539, 4
      %v1618 = vpop.permute.xlu0 %1617
      %1619 = vrot.lane.b32.xlu0 %v1542, 4
      %v1620 = vpop.permute.xlu0 %1619
      %1621 = vrot.lane.b32.xlu0 %v1544, 4
      %v1622 = vpop.permute.xlu0 %1621
      %1623 = vrot.lane.b32.xlu0 %v1547, 4
      %v1624 = vpop.permute.xlu0 %1623
      %1625 = vrot.lane.b32.xlu0 %v1549, 4
      %v1626 = vpop.permute.xlu0 %1625
      %1627 = vrot.lane.b32.xlu0 %v1552, 4
      %v1628 = vpop.permute.xlu0 %1627
      %1629 = vrot.lane.b32.xlu0 %v1554, 4
      %v1630 = vpop.permute.xlu0 %1629
      %1631 = vrot.lane.b32.xlu0 %v1557, 4
      %v1632 = vpop.permute.xlu0 %1631
      %1633 = vrot.lane.b32.xlu0 %v1559, 4
      %v1634 = vpop.permute.xlu0 %1633
      %1635 = vrot.lane.b32.xlu0 %v1562, 4
      %v1636 = vpop.permute.xlu0 %1635
      %1637 = vrot.lane.b32.xlu0 %v1564, 4
      %v1638 = vpop.permute.xlu0 %1637
      %1639 = vrot.lane.b32.xlu0 %v1567, 4
      %v1640 = vpop.permute.xlu0 %1639
      %1641 = vrot.lane.b32.xlu0 %v1569, 4
      %v1642 = vpop.permute.xlu0 %1641
      %1643 = vrot.lane.b32.xlu0 %v1572, 4
      %v1644 = vpop.permute.xlu0 %1643
      %1645 = vrot.lane.b32.xlu0 %v1574, 4
      %v1646 = vpop.permute.xlu0 %1645
      %1647 = vrot.lane.b32.xlu0 %v1577, 4
      %v1648 = vpop.permute.xlu0 %1647
      %1649 = vrot.lane.b32.xlu0 %v1579, 4
      %v1650 = vpop.permute.xlu0 %1649
      %1651 = vrot.lane.b32.xlu0 %v1582, 4
      %v1652 = vpop.permute.xlu0 %1651
      %1653 = vrot.lane.b32.xlu0 %v1584, 4
      %v1654 = vpop.permute.xlu0 %1653
      %1655 = vrot.lane.b32.xlu0 %v1587, 4
      %v1656 = vpop.permute.xlu0 %1655
      %1657 = vrot.lane.b32.xlu0 %v1589, 4
      %v1658 = vpop.permute.xlu0 %1657
      %1659 = vrot.lane.b32.xlu0 %v1592, 4
      %v1660 = vpop.permute.xlu0 %1659
      %1661 = vrot.lane.b32.xlu0 %v1594, 4
      %v1662 = vpop.permute.xlu0 %1661
      %1663 = vrot.lane.b32.xlu0 %v1597, 4
      %v1664 = vpop.permute.xlu0 %1663
      %1665 = vrot.lane.b32.xlu0 %v1599, 4
      %v1666 = vpop.permute.xlu0 %1665
      %1667 = vrot.lane.b32.xlu0 %v1602, 4
      %v1668 = vpop.permute.xlu0 %1667
      %1669 = vrot.lane.b32.xlu0 %v1604, 4
      %v1670 = vpop.permute.xlu0 %1669
      %1671 = vrot.lane.b32.xlu0 %v1607, 4
      %v1672 = vpop.permute.xlu0 %1671
      %1673 = vrot.lane.b32.xlu0 %v1609, 4
      %v1674 = vpop.permute.xlu0 %1673
      %1675 = vrot.lane.b32.xlu0 %v1612, 4
      %v1676 = vpop.permute.xlu0 %1675
      %1677 = vrot.lane.b32.xlu0 %v1614, 4
      %v1678 = vpop.permute.xlu0 %1677
      %vm1711 = vcmask 64544
      %1712 = vst.msk [vmem:[#allocation2] sm:$0xff] %vm1711, %v1616
      %1713 = vst.msk [vmem:[#allocation2 + $0x8] sm:$0xff] %vm1711, %v1618
      %1714 = vst.msk [vmem:[#allocation2 + $0x10] sm:$0xff] %vm1711, %v1620
      %1715 = vst.msk [vmem:[#allocation2 + $0x18] sm:$0xff] %vm1711, %v1622
      %1716 = vst.msk [vmem:[#allocation2 + $0x20] sm:$0xff] %vm1711, %v1624
      %1717 = vst.msk [vmem:[#allocation2 + $0x28] sm:$0xff] %vm1711, %v1626
      %1718 = vst.msk [vmem:[#allocation2 + $0x30] sm:$0xff] %vm1711, %v1628
      %1719 = vst.msk [vmem:[#allocation2 + $0x38] sm:$0xff] %vm1711, %v1630
      %1720 = vst.msk [vmem:[#allocation2 + $0x40] sm:$0xff] %vm1711, %v1632
      %1721 = vst.msk [vmem:[#allocation2 + $0x48] sm:$0xff] %vm1711, %v1634
      %1722 = vst.msk [vmem:[#allocation2 + $0x50] sm:$0xff] %vm1711, %v1636
      %1723 = vst.msk [vmem:[#allocation2 + $0x58] sm:$0xff] %vm1711, %v1638
      %1724 = vst.msk [vmem:[#allocation2 + $0x60] sm:$0xff] %vm1711, %v1640
      %1725 = vst.msk [vmem:[#allocation2 + $0x68] sm:$0xff] %vm1711, %v1642
      %1726 = vst.msk [vmem:[#allocation2 + $0x70] sm:$0xff] %vm1711, %v1644
      %1727 = vst.msk [vmem:[#allocation2 + $0x78] sm:$0xff] %vm1711, %v1646
      %1728 = vst.msk [vmem:[#allocation2 + $0x80] sm:$0xff] %vm1711, %v1648
      %1729 = vst.msk [vmem:[#allocation2 + $0x88] sm:$0xff] %vm1711, %v1650
      %1730 = vst.msk [vmem:[#allocation2 + $0x90] sm:$0xff] %vm1711, %v1652
      %1731 = vst.msk [vmem:[#allocation2 + $0x98] sm:$0xff] %vm1711, %v1654
      %1732 = vst.msk [vmem:[#allocation2 + $0xa0] sm:$0xff] %vm1711, %v1656
      %1733 = vst.msk [vmem:[#allocation2 + $0xa8] sm:$0xff] %vm1711, %v1658
      %1734 = vst.msk [vmem:[#allocation2 + $0xb0] sm:$0xff] %vm1711, %v1660
      %1735 = vst.msk [vmem:[#allocation2 + $0xb8] sm:$0xff] %vm1711, %v1662
      %1736 = vst.msk [vmem:[#allocation2 + $0xc0] sm:$0xff] %vm1711, %v1664
      %1737 = vst.msk [vmem:[#allocation2 + $0xc8] sm:$0xff] %vm1711, %v1666
      %1738 = vst.msk [vmem:[#allocation2 + $0xd0] sm:$0xff] %vm1711, %v1668
      %1739 = vst.msk [vmem:[#allocation2 + $0xd8] sm:$0xff] %vm1711, %v1670
      %1740 = vst.msk [vmem:[#allocation2 + $0xe0] sm:$0xff] %vm1711, %v1672
      %1741 = vst.msk [vmem:[#allocation2 + $0xe8] sm:$0xff] %vm1711, %v1674
      %1742 = vst.msk [vmem:[#allocation2 + $0xf0] sm:$0xff] %vm1711, %v1676
      %1743 = vst.msk [vmem:[#allocation2 + $0xf8] sm:$0xff] %vm1711, %v1678
      %vm1744 = vcmask 1045504
      %v1745 = vrot.slane %v1399, 2
      %v1746 = vrot.slane %v1400, 2
      %v1747 = vsel %vm1744, %v1745, %v1746
      %v1748 = vrot.slane %v1401, 2
      %v1749 = vsel %vm1744, %v1746, %v1748
      %v1750 = vrot.slane %v1402, 2
      %v1751 = vrot.slane %v1403, 2
      %v1752 = vsel %vm1744, %v1750, %v1751
      %v1753 = vrot.slane %v1404, 2
      %v1754 = vsel %vm1744, %v1751, %v1753
      %v1755 = vrot.slane %v1405, 2
      %v1756 = vrot.slane %v1406, 2
      %v1757 = vsel %vm1744, %v1755, %v1756
      %v1758 = vrot.slane %v1407, 2
      %v1759 = vsel %vm1744, %v1756, %v1758
      %v1760 = vrot.slane %v1408, 2
      %v1761 = vrot.slane %v1409, 2
      %v1762 = vsel %vm1744, %v1760, %v1761
      %v1763 = vrot.slane %v1410, 2
      %v1764 = vsel %vm1744, %v1761, %v1763
      %v1765 = vrot.slane %v1411, 2
      %v1766 = vrot.slane %v1412, 2
      %v1767 = vsel %vm1744, %v1765, %v1766
      %v1768 = vrot.slane %v1413, 2
      %v1769 = vsel %vm1744, %v1766, %v1768
      %v1770 = vrot.slane %v1414, 2
      %v1771 = vrot.slane %v1415, 2
      %v1772 = vsel %vm1744, %v1770, %v1771
      %v1773 = vrot.slane %v1416, 2
      %v1774 = vsel %vm1744, %v1771, %v1773
      %v1775 = vrot.slane %v1417, 2
      %v1776 = vrot.slane %v1418, 2
      %v1777 = vsel %vm1744, %v1775, %v1776
      %v1778 = vrot.slane %v1419, 2
      %v1779 = vsel %vm1744, %v1776, %v1778
      %v1780 = vrot.slane %v1420, 2
      %v1781 = vrot.slane %v1421, 2
      %v1782 = vsel %vm1744, %v1780, %v1781
      %v1783 = vrot.slane %v1422, 2
      %v1784 = vsel %vm1744, %v1781, %v1783
      %v1785 = vrot.slane %v1423, 2
      %v1786 = vrot.slane %v1424, 2
      %v1787 = vsel %vm1744, %v1785, %v1786
      %v1788 = vrot.slane %v1425, 2
      %v1789 = vsel %vm1744, %v1786, %v1788
      %v1790 = vrot.slane %v1426, 2
      %v1791 = vrot.slane %v1427, 2
      %v1792 = vsel %vm1744, %v1790, %v1791
      %v1793 = vrot.slane %v1428, 2
      %v1794 = vsel %vm1744, %v1791, %v1793
      %v1795 = vrot.slane %v1429, 2
      %v1796 = vrot.slane %v1430, 2
      %v1797 = vsel %vm1744, %v1795, %v1796
      %v1798 = vrot.slane %v1431, 2
      %v1799 = vsel %vm1744, %v1796, %v1798
      %v1800 = vrot.slane %v1432, 2
      %v1801 = vrot.slane %v1433, 2
      %v1802 = vsel %vm1744, %v1800, %v1801
      %v1803 = vrot.slane %v1434, 2
      %v1804 = vsel %vm1744, %v1801, %v1803
      %v1805 = vrot.slane %v1435, 2
      %v1806 = vrot.slane %v1436, 2
      %v1807 = vsel %vm1744, %v1805, %v1806
      %v1808 = vrot.slane %v1437, 2
      %v1809 = vsel %vm1744, %v1806, %v1808
      %v1810 = vrot.slane %v1438, 2
      %v1811 = vrot.slane %v1439, 2
      %v1812 = vsel %vm1744, %v1810, %v1811
      %v1813 = vrot.slane %v1440, 2
      %v1814 = vsel %vm1744, %v1811, %v1813
      %v1815 = vrot.slane %v1441, 2
      %v1816 = vrot.slane %v1442, 2
      %v1817 = vsel %vm1744, %v1815, %v1816
      %v1818 = vrot.slane %v1443, 2
      %v1819 = vsel %vm1744, %v1816, %v1818
      %v1820 = vrot.slane %v1444, 2
      %v1821 = vrot.slane %v1445, 2
      %v1822 = vsel %vm1744, %v1820, %v1821
      %v1823 = vrot.slane %v1446, 2
      %v1824 = vsel %vm1744, %v1821, %v1823
      %1825 = vrot.lane.b32.xlu0 %v1747, 8
      %v1826 = vpop.permute.xlu0 %1825
      %1827 = vrot.lane.b32.xlu0 %v1749, 8
      %v1828 = vpop.permute.xlu0 %1827
      %1829 = vrot.lane.b32.xlu0 %v1752, 8
      %v1830 = vpop.permute.xlu0 %1829
      %1831 = vrot.lane.b32.xlu0 %v1754, 8
      %v1832 = vpop.permute.xlu0 %1831
      %1833 = vrot.lane.b32.xlu0 %v1757, 8
      %v1834 = vpop.permute.xlu0 %1833
      %1835 = vrot.lane.b32.xlu0 %v1759, 8
      %v1836 = vpop.permute.xlu0 %1835
      %1837 = vrot.lane.b32.xlu0 %v1762, 8
      %v1838 = vpop.permute.xlu0 %1837
      %1839 = vrot.lane.b32.xlu0 %v1764, 8
      %v1840 = vpop.permute.xlu0 %1839
      %1841 = vrot.lane.b32.xlu0 %v1767, 8
      %v1842 = vpop.permute.xlu0 %1841
      %1843 = vrot.lane.b32.xlu0 %v1769, 8
      %v1844 = vpop.permute.xlu0 %1843
      %1845 = vrot.lane.b32.xlu0 %v1772, 8
      %v1846 = vpop.permute.xlu0 %1845
      %1847 = vrot.lane.b32.xlu0 %v1774, 8
      %v1848 = vpop.permute.xlu0 %1847
      %1849 = vrot.lane.b32.xlu0 %v1777, 8
      %v1850 = vpop.permute.xlu0 %1849
      %1851 = vrot.lane.b32.xlu0 %v1779, 8
      %v1852 = vpop.permute.xlu0 %1851
      %1853 = vrot.lane.b32.xlu0 %v1782, 8
      %v1854 = vpop.permute.xlu0 %1853
      %1855 = vrot.lane.b32.xlu0 %v1784, 8
      %v1856 = vpop.permute.xlu0 %1855
      %1857 = vrot.lane.b32.xlu0 %v1787, 8
      %v1858 = vpop.permute.xlu0 %1857
      %1859 = vrot.lane.b32.xlu0 %v1789, 8
      %v1860 = vpop.permute.xlu0 %1859
      %1861 = vrot.lane.b32.xlu0 %v1792, 8
      %v1862 = vpop.permute.xlu0 %1861
      %1863 = vrot.lane.b32.xlu0 %v1794, 8
      %v1864 = vpop.permute.xlu0 %1863
      %1865 = vrot.lane.b32.xlu0 %v1797, 8
      %v1866 = vpop.permute.xlu0 %1865
      %1867 = vrot.lane.b32.xlu0 %v1799, 8
      %v1868 = vpop.permute.xlu0 %1867
      %1869 = vrot.lane.b32.xlu0 %v1802, 8
      %v1870 = vpop.permute.xlu0 %1869
      %1871 = vrot.lane.b32.xlu0 %v1804, 8
      %v1872 = vpop.permute.xlu0 %1871
      %1873 = vrot.lane.b32.xlu0 %v1807, 8
      %v1874 = vpop.permute.xlu0 %1873
      %1875 = vrot.lane.b32.xlu0 %v1809, 8
      %v1876 = vpop.permute.xlu0 %1875
      %1877 = vrot.lane.b32.xlu0 %v1812, 8
      %v1878 = vpop.permute.xlu0 %1877
      %1879 = vrot.lane.b32.xlu0 %v1814, 8
      %v1880 = vpop.permute.xlu0 %1879
      %1881 = vrot.lane.b32.xlu0 %v1817, 8
      %v1882 = vpop.permute.xlu0 %1881
      %1883 = vrot.lane.b32.xlu0 %v1819, 8
      %v1884 = vpop.permute.xlu0 %1883
      %1885 = vrot.lane.b32.xlu0 %v1822, 8
      %v1886 = vpop.permute.xlu0 %1885
      %1887 = vrot.lane.b32.xlu0 %v1824, 8
      %v1888 = vpop.permute.xlu0 %1887
      %vm1921 = vcmask 97344
      %1922 = vst.msk [vmem:[#allocation2] sm:$0xff] %vm1921, %v1826
      %1923 = vst.msk [vmem:[#allocation2 + $0x8] sm:$0xff] %vm1921, %v1828
      %1924 = vst.msk [vmem:[#allocation2 + $0x10] sm:$0xff] %vm1921, %v1830
      %1925 = vst.msk [vmem:[#allocation2 + $0x18] sm:$0xff] %vm1921, %v1832
      %1926 = vst.msk [vmem:[#allocation2 + $0x20] sm:$0xff] %vm1921, %v1834
      %1927 = vst.msk [vmem:[#allocation2 + $0x28] sm:$0xff] %vm1921, %v1836
      %1928 = vst.msk [vmem:[#allocation2 + $0x30] sm:$0xff] %vm1921, %v1838
      %1929 = vst.msk [vmem:[#allocation2 + $0x38] sm:$0xff] %vm1921, %v1840
      %1930 = vst.msk [vmem:[#allocation2 + $0x40] sm:$0xff] %vm1921, %v1842
      %1931 = vst.msk [vmem:[#allocation2 + $0x48] sm:$0xff] %vm1921, %v1844
      %1932 = vst.msk [vmem:[#allocation2 + $0x50] sm:$0xff] %vm1921, %v1846
      %1933 = vst.msk [vmem:[#allocation2 + $0x58] sm:$0xff] %vm1921, %v1848
      %1934 = vst.msk [vmem:[#allocation2 + $0x60] sm:$0xff] %vm1921, %v1850
      %1935 = vst.msk [vmem:[#allocation2 + $0x68] sm:$0xff] %vm1921, %v1852
      %1936 = vst.msk [vmem:[#allocation2 + $0x70] sm:$0xff] %vm1921, %v1854
      %1937 = vst.msk [vmem:[#allocation2 + $0x78] sm:$0xff] %vm1921, %v1856
      %1938 = vst.msk [vmem:[#allocation2 + $0x80] sm:$0xff] %vm1921, %v1858
      %1939 = vst.msk [vmem:[#allocation2 + $0x88] sm:$0xff] %vm1921, %v1860
      %1940 = vst.msk [vmem:[#allocation2 + $0x90] sm:$0xff] %vm1921, %v1862
      %1941 = vst.msk [vmem:[#allocation2 + $0x98] sm:$0xff] %vm1921, %v1864
      %1942 = vst.msk [vmem:[#allocation2 + $0xa0] sm:$0xff] %vm1921, %v1866
      %1943 = vst.msk [vmem:[#allocation2 + $0xa8] sm:$0xff] %vm1921, %v1868
      %1944 = vst.msk [vmem:[#allocation2 + $0xb0] sm:$0xff] %vm1921, %v1870
      %1945 = vst.msk [vmem:[#allocation2 + $0xb8] sm:$0xff] %vm1921, %v1872
      %1946 = vst.msk [vmem:[#allocation2 + $0xc0] sm:$0xff] %vm1921, %v1874
      %1947 = vst.msk [vmem:[#allocation2 + $0xc8] sm:$0xff] %vm1921, %v1876
      %1948 = vst.msk [vmem:[#allocation2 + $0xd0] sm:$0xff] %vm1921, %v1878
      %1949 = vst.msk [vmem:[#allocation2 + $0xd8] sm:$0xff] %vm1921, %v1880
      %1950 = vst.msk [vmem:[#allocation2 + $0xe0] sm:$0xff] %vm1921, %v1882
      %1951 = vst.msk [vmem:[#allocation2 + $0xe8] sm:$0xff] %vm1921, %v1884
      %1952 = vst.msk [vmem:[#allocation2 + $0xf0] sm:$0xff] %vm1921, %v1886
      %1953 = vst.msk [vmem:[#allocation2 + $0xf8] sm:$0xff] %vm1921, %v1888
      %1956 = vrot.lane.b32.xlu0 %v1402, 12
      %v1957 = vpop.permute.xlu0 %1956
      %1958 = vrot.lane.b32.xlu0 %v1403, 12
      %v1959 = vpop.permute.xlu0 %1958
      %1960 = vrot.lane.b32.xlu0 %v1405, 12
      %v1961 = vpop.permute.xlu0 %1960
      %1962 = vrot.lane.b32.xlu0 %v1406, 12
      %v1963 = vpop.permute.xlu0 %1962
      %1964 = vrot.lane.b32.xlu0 %v1408, 12
      %v1965 = vpop.permute.xlu0 %1964
      %1966 = vrot.lane.b32.xlu0 %v1409, 12
      %v1967 = vpop.permute.xlu0 %1966
      %1968 = vrot.lane.b32.xlu0 %v1411, 12
      %v1969 = vpop.permute.xlu0 %1968
      %1970 = vrot.lane.b32.xlu0 %v1412, 12
      %v1971 = vpop.permute.xlu0 %1970
      %1972 = vrot.lane.b32.xlu0 %v1414, 12
      %v1973 = vpop.permute.xlu0 %1972
      %1974 = vrot.lane.b32.xlu0 %v1415, 12
      %v1975 = vpop.permute.xlu0 %1974
      %1976 = vrot.lane.b32.xlu0 %v1417, 12
      %v1977 = vpop.permute.xlu0 %1976
      %1978 = vrot.lane.b32.xlu0 %v1418, 12
      %v1979 = vpop.permute.xlu0 %1978
      %1980 = vrot.lane.b32.xlu0 %v1420, 12
      %v1981 = vpop.permute.xlu0 %1980
      %1982 = vrot.lane.b32.xlu0 %v1421, 12
      %v1983 = vpop.permute.xlu0 %1982
      %1984 = vrot.lane.b32.xlu0 %v1423, 12
      %v1985 = vpop.permute.xlu0 %1984
      %1986 = vrot.lane.b32.xlu0 %v1424, 12
      %v1987 = vpop.permute.xlu0 %1986
      %1988 = vrot.lane.b32.xlu0 %v1426, 12
      %v1989 = vpop.permute.xlu0 %1988
      %1990 = vrot.lane.b32.xlu0 %v1427, 12
      %v1991 = vpop.permute.xlu0 %1990
      %1992 = vrot.lane.b32.xlu0 %v1429, 12
      %v1993 = vpop.permute.xlu0 %1992
      %1994 = vrot.lane.b32.xlu0 %v1430, 12
      %v1995 = vpop.permute.xlu0 %1994
      %1996 = vrot.lane.b32.xlu0 %v1432, 12
      %v1997 = vpop.permute.xlu0 %1996
      %1998 = vrot.lane.b32.xlu0 %v1433, 12
      %v1999 = vpop.permute.xlu0 %1998
      %2000 = vrot.lane.b32.xlu0 %v1435, 12
      %v2001 = vpop.permute.xlu0 %2000
      %2002 = vrot.lane.b32.xlu0 %v1436, 12
      %v2003 = vpop.permute.xlu0 %2002
      %2004 = vrot.lane.b32.xlu0 %v1438, 12
      %v2005 = vpop.permute.xlu0 %2004
      %2006 = vrot.lane.b32.xlu0 %v1439, 12
      %v2007 = vpop.permute.xlu0 %2006
      %2008 = vrot.lane.b32.xlu0 %v1441, 12
      %v2009 = vpop.permute.xlu0 %2008
      %2010 = vrot.lane.b32.xlu0 %v1442, 12
      %v2011 = vpop.permute.xlu0 %2010
      %2012 = vrot.lane.b32.xlu0 %v1444, 12
      %v2013 = vpop.permute.xlu0 %2012
      %2014 = vrot.lane.b32.xlu0 %v1445, 12
      %v2015 = vpop.permute.xlu0 %2014
      %2016 = vrot.lane.b32.xlu0 %v1447, 12
      %v2017 = vpop.permute.xlu0 %2016
      %2018 = vrot.lane.b32.xlu0 %v1448, 12
      %v2019 = vpop.permute.xlu0 %2018
      %vm2052 = vcmask 130144
      %2053 = vst.msk [vmem:[#allocation2] sm:$0xff] %vm2052, %v1957
      %2054 = vst.msk [vmem:[#allocation2 + $0x8] sm:$0xff] %vm2052, %v1959
      %2055 = vst.msk [vmem:[#allocation2 + $0x10] sm:$0xff] %vm2052, %v1961
      %2056 = vst.msk [vmem:[#allocation2 + $0x18] sm:$0xff] %vm2052, %v1963
      %2057 = vst.msk [vmem:[#allocation2 + $0x20] sm:$0xff] %vm2052, %v1965
      %2058 = vst.msk [vmem:[#allocation2 + $0x28] sm:$0xff] %vm2052, %v1967
      %2059 = vst.msk [vmem:[#allocation2 + $0x30] sm:$0xff] %vm2052, %v1969
      %2060 = vst.msk [vmem:[#allocation2 + $0x38] sm:$0xff] %vm2052, %v1971
      %2061 = vst.msk [vmem:[#allocation2 + $0x40] sm:$0xff] %vm2052, %v1973
      %2062 = vst.msk [vmem:[#allocation2 + $0x48] sm:$0xff] %vm2052, %v1975
      %2063 = vst.msk [vmem:[#allocation2 + $0x50] sm:$0xff] %vm2052, %v1977
      %2064 = vst.msk [vmem:[#allocation2 + $0x58] sm:$0xff] %vm2052, %v1979
      %2065 = vst.msk [vmem:[#allocation2 + $0x60] sm:$0xff] %vm2052, %v1981
      %2066 = vst.msk [vmem:[#allocation2 + $0x68] sm:$0xff] %vm2052, %v1983
      %2067 = vst.msk [vmem:[#allocation2 + $0x70] sm:$0xff] %vm2052, %v1985
      %2068 = vst.msk [vmem:[#allocation2 + $0x78] sm:$0xff] %vm2052, %v1987
      %2069 = vst.msk [vmem:[#allocation2 + $0x80] sm:$0xff] %vm2052, %v1989
      %2070 = vst.msk [vmem:[#allocation2 + $0x88] sm:$0xff] %vm2052, %v1991
      %2071 = vst.msk [vmem:[#allocation2 + $0x90] sm:$0xff] %vm2052, %v1993
      %2072 = vst.msk [vmem:[#allocation2 + $0x98] sm:$0xff] %vm2052, %v1995
      %2073 = vst.msk [vmem:[#allocation2 + $0xa0] sm:$0xff] %vm2052, %v1997
      %2074 = vst.msk [vmem:[#allocation2 + $0xa8] sm:$0xff] %vm2052, %v1999
      %2075 = vst.msk [vmem:[#allocation2 + $0xb0] sm:$0xff] %vm2052, %v2001
      %2076 = vst.msk [vmem:[#allocation2 + $0xb8] sm:$0xff] %vm2052, %v2003
      %2077 = vst.msk [vmem:[#allocation2 + $0xc0] sm:$0xff] %vm2052, %v2005
      %2078 = vst.msk [vmem:[#allocation2 + $0xc8] sm:$0xff] %vm2052, %v2007
      %2079 = vst.msk [vmem:[#allocation2 + $0xd0] sm:$0xff] %vm2052, %v2009
      %2080 = vst.msk [vmem:[#allocation2 + $0xd8] sm:$0xff] %vm2052, %v2011
      %2081 = vst.msk [vmem:[#allocation2 + $0xe0] sm:$0xff] %vm2052, %v2013
      %2082 = vst.msk [vmem:[#allocation2 + $0xe8] sm:$0xff] %vm2052, %v2015
      %2083 = vst.msk [vmem:[#allocation2 + $0xf0] sm:$0xff] %vm2052, %v2017
      %2084 = vst.msk [vmem:[#allocation2 + $0xf8] sm:$0xff] %vm2052, %v2019
      %v2086 = vrot.slane %v1447, 1
      %v2087 = vrot.slane %v1448, 1
      %v2088 = vsel %vm1534, %v2086, %v2087
      %v2089 = vrot.slane %v1449, 1
      %v2090 = vsel %vm1534, %v2087, %v2089
      %2091 = vrot.lane.b32.xlu0 %v1542, 16
      %v2092 = vpop.permute.xlu0 %2091
      %2093 = vrot.lane.b32.xlu0 %v1544, 16
      %v2094 = vpop.permute.xlu0 %2093
      %2095 = vrot.lane.b32.xlu0 %v1547, 16
      %v2096 = vpop.permute.xlu0 %2095
      %2097 = vrot.lane.b32.xlu0 %v1549, 16
      %v2098 = vpop.permute.xlu0 %2097
      %2099 = vrot.lane.b32.xlu0 %v1552, 16
      %v2100 = vpop.permute.xlu0 %2099
      %2101 = vrot.lane.b32.xlu0 %v1554, 16
      %v2102 = vpop.permute.xlu0 %2101
      %2103 = vrot.lane.b32.xlu0 %v1557, 16
      %v2104 = vpop.permute.xlu0 %2103
      %2105 = vrot.lane.b32.xlu0 %v1559, 16
      %v2106 = vpop.permute.xlu0 %2105
      %2107 = vrot.lane.b32.xlu0 %v1562, 16
      %v2108 = vpop.permute.xlu0 %2107
      %2109 = vrot.lane.b32.xlu0 %v1564, 16
      %v2110 = vpop.permute.xlu0 %2109
      %2111 = vrot.lane.b32.xlu0 %v1567, 16
      %v2112 = vpop.permute.xlu0 %2111
      %2113 = vrot.lane.b32.xlu0 %v1569, 16
      %v2114 = vpop.permute.xlu0 %2113
      %2115 = vrot.lane.b32.xlu0 %v1572, 16
      %v2116 = vpop.permute.xlu0 %2115
      %2117 = vrot.lane.b32.xlu0 %v1574, 16
      %v2118 = vpop.permute.xlu0 %2117
      %2119 = vrot.lane.b32.xlu0 %v1577, 16
      %v2120 = vpop.permute.xlu0 %2119
      %2121 = vrot.lane.b32.xlu0 %v1579, 16
      %v2122 = vpop.permute.xlu0 %2121
      %2123 = vrot.lane.b32.xlu0 %v1582, 16
      %v2124 = vpop.permute.xlu0 %2123
      %2125 = vrot.lane.b32.xlu0 %v1584, 16
      %v2126 = vpop.permute.xlu0 %2125
      %2127 = vrot.lane.b32.xlu0 %v1587, 16
      %v2128 = vpop.permute.xlu0 %2127
      %2129 = vrot.lane.b32.xlu0 %v1589, 16
      %v2130 = vpop.permute.xlu0 %2129
      %2131 = vrot.lane.b32.xlu0 %v1592, 16
      %v2132 = vpop.permute.xlu0 %2131
      %2133 = vrot.lane.b32.xlu0 %v1594, 16
      %v2134 = vpop.permute.xlu0 %2133
      %2135 = vrot.lane.b32.xlu0 %v1597, 16
      %v2136 = vpop.permute.xlu0 %2135
      %2137 = vrot.lane.b32.xlu0 %v1599, 16
      %v2138 = vpop.permute.xlu0 %2137
      %2139 = vrot.lane.b32.xlu0 %v1602, 16
      %v2140 = vpop.permute.xlu0 %2139
      %2141 = vrot.lane.b32.xlu0 %v1604, 16
      %v2142 = vpop.permute.xlu0 %2141
      %2143 = vrot.lane.b32.xlu0 %v1607, 16
      %v2144 = vpop.permute.xlu0 %2143
      %2145 = vrot.lane.b32.xlu0 %v1609, 16
      %v2146 = vpop.permute.xlu0 %2145
      %2147 = vrot.lane.b32.xlu0 %v1612, 16
      %v2148 = vpop.permute.xlu0 %2147
      %2149 = vrot.lane.b32.xlu0 %v1614, 16
      %v2150 = vpop.permute.xlu0 %2149
      %2151 = vrot.lane.b32.xlu0 %v2088, 16
      %v2152 = vpop.permute.xlu0 %2151
      %2153 = vrot.lane.b32.xlu0 %v2090, 16
      %v2154 = vpop.permute.xlu0 %2153
      %vm2187 = vcmask 162944
      %2188 = vst.msk [vmem:[#allocation2] sm:$0xff] %vm2187, %v2092
      %2189 = vst.msk [vmem:[#allocation2 + $0x8] sm:$0xff] %vm2187, %v2094
      %2190 = vst.msk [vmem:[#allocation2 + $0x10] sm:$0xff] %vm2187, %v2096
      %2191 = vst.msk [vmem:[#allocation2 + $0x18] sm:$0xff] %vm2187, %v2098
      %2192 = vst.msk [vmem:[#allocation2 + $0x20] sm:$0xff] %vm2187, %v2100
      %2193 = vst.msk [vmem:[#allocation2 + $0x28] sm:$0xff] %vm2187, %v2102
      %2194 = vst.msk [vmem:[#allocation2 + $0x30] sm:$0xff] %vm2187, %v2104
      %2195 = vst.msk [vmem:[#allocation2 + $0x38] sm:$0xff] %vm2187, %v2106
      %2196 = vst.msk [vmem:[#allocation2 + $0x40] sm:$0xff] %vm2187, %v2108
      %2197 = vst.msk [vmem:[#allocation2 + $0x48] sm:$0xff] %vm2187, %v2110
      %2198 = vst.msk [vmem:[#allocation2 + $0x50] sm:$0xff] %vm2187, %v2112
      %2199 = vst.msk [vmem:[#allocation2 + $0x58] sm:$0xff] %vm2187, %v2114
      %2200 = vst.msk [vmem:[#allocation2 + $0x60] sm:$0xff] %vm2187, %v2116
      %2201 = vst.msk [vmem:[#allocation2 + $0x68] sm:$0xff] %vm2187, %v2118
      %2202 = vst.msk [vmem:[#allocation2 + $0x70] sm:$0xff] %vm2187, %v2120
      %2203 = vst.msk [vmem:[#allocation2 + $0x78] sm:$0xff] %vm2187, %v2122
      %2204 = vst.msk [vmem:[#allocation2 + $0x80] sm:$0xff] %vm2187, %v2124
      %2205 = vst.msk [vmem:[#allocation2 + $0x88] sm:$0xff] %vm2187, %v2126
      %2206 = vst.msk [vmem:[#allocation2 + $0x90] sm:$0xff] %vm2187, %v2128
      %2207 = vst.msk [vmem:[#allocation2 + $0x98] sm:$0xff] %vm2187, %v2130
      %2208 = vst.msk [vmem:[#allocation2 + $0xa0] sm:$0xff] %vm2187, %v2132
      %2209 = vst.msk [vmem:[#allocation2 + $0xa8] sm:$0xff] %vm2187, %v2134
      %2210 = vst.msk [vmem:[#allocation2 + $0xb0] sm:$0xff] %vm2187, %v2136
      %2211 = vst.msk [vmem:[#allocation2 + $0xb8] sm:$0xff] %vm2187, %v2138
      %2212 = vst.msk [vmem:[#allocation2 + $0xc0] sm:$0xff] %vm2187, %v2140
      %2213 = vst.msk [vmem:[#allocation2 + $0xc8] sm:$0xff] %vm2187, %v2142
      %2214 = vst.msk [vmem:[#allocation2 + $0xd0] sm:$0xff] %vm2187, %v2144
      %2215 = vst.msk [vmem:[#allocation2 + $0xd8] sm:$0xff] %vm2187, %v2146
      %2216 = vst.msk [vmem:[#allocation2 + $0xe0] sm:$0xff] %vm2187, %v2148
      %2217 = vst.msk [vmem:[#allocation2 + $0xe8] sm:$0xff] %vm2187, %v2150
      %2218 = vst.msk [vmem:[#allocation2 + $0xf0] sm:$0xff] %vm2187, %v2152
      %2219 = vst.msk [vmem:[#allocation2 + $0xf8] sm:$0xff] %vm2187, %v2154
      %v2220 = vrot.slane %v1447, 2
      %v2221 = vrot.slane %v1448, 2
      %v2222 = vsel %vm1744, %v2220, %v2221
      %v2223 = vrot.slane %v1449, 2
      %v2224 = vsel %vm1744, %v2221, %v2223
      %2225 = vrot.lane.b32.xlu0 %v1752, 20
      %v2226 = vpop.permute.xlu0 %2225
      %2227 = vrot.lane.b32.xlu0 %v1754, 20
      %v2228 = vpop.permute.xlu0 %2227
      %2229 = vrot.lane.b32.xlu0 %v1757, 20
      %v2230 = vpop.permute.xlu0 %2229
      %2231 = vrot.lane.b32.xlu0 %v1759, 20
      %v2232 = vpop.permute.xlu0 %2231
      %2233 = vrot.lane.b32.xlu0 %v1762, 20
      %v2234 = vpop.permute.xlu0 %2233
      %2235 = vrot.lane.b32.xlu0 %v1764, 20
      %v2236 = vpop.permute.xlu0 %2235
      %2237 = vrot.lane.b32.xlu0 %v1767, 20
      %v2238 = vpop.permute.xlu0 %2237
      %2239 = vrot.lane.b32.xlu0 %v1769, 20
      %v2240 = vpop.permute.xlu0 %2239
      %2241 = vrot.lane.b32.xlu0 %v1772, 20
      %v2242 = vpop.permute.xlu0 %2241
      %2243 = vrot.lane.b32.xlu0 %v1774, 20
      %v2244 = vpop.permute.xlu0 %2243
      %2245 = vrot.lane.b32.xlu0 %v1777, 20
      %v2246 = vpop.permute.xlu0 %2245
      %2247 = vrot.lane.b32.xlu0 %v1779, 20
      %v2248 = vpop.permute.xlu0 %2247
      %2249 = vrot.lane.b32.xlu0 %v1782, 20
      %v2250 = vpop.permute.xlu0 %2249
      %2251 = vrot.lane.b32.xlu0 %v1784, 20
      %v2252 = vpop.permute.xlu0 %2251
      %2253 = vrot.lane.b32.xlu0 %v1787, 20
      %v2254 = vpop.permute.xlu0 %2253
      %2255 = vrot.lane.b32.xlu0 %v1789, 20
      %v2256 = vpop.permute.xlu0 %2255
      %2257 = vrot.lane.b32.xlu0 %v1792, 20
      %v2258 = vpop.permute.xlu0 %2257
      %2259 = vrot.lane.b32.xlu0 %v1794, 20
      %v2260 = vpop.permute.xlu0 %2259
      %2261 = vrot.lane.b32.xlu0 %v1797, 20
      %v2262 = vpop.permute.xlu0 %2261
      %2263 = vrot.lane.b32.xlu0 %v1799, 20
      %v2264 = vpop.permute.xlu0 %2263
      %2265 = vrot.lane.b32.xlu0 %v1802, 20
      %v2266 = vpop.permute.xlu0 %2265
      %2267 = vrot.lane.b32.xlu0 %v1804, 20
      %v2268 = vpop.permute.xlu0 %2267
      %2269 = vrot.lane.b32.xlu0 %v1807, 20
      %v2270 = vpop.permute.xlu0 %2269
      %2271 = vrot.lane.b32.xlu0 %v1809, 20
      %v2272 = vpop.permute.xlu0 %2271
      %2273 = vrot.lane.b32.xlu0 %v1812, 20
      %v2274 = vpop.permute.xlu0 %2273
      %2275 = vrot.lane.b32.xlu0 %v1814, 20
      %v2276 = vpop.permute.xlu0 %2275
      %2277 = vrot.lane.b32.xlu0 %v1817, 20
      %v2278 = vpop.permute.xlu0 %2277
      %2279 = vrot.lane.b32.xlu0 %v1819, 20
      %v2280 = vpop.permute.xlu0 %2279
      %2281 = vrot.lane.b32.xlu0 %v1822, 20
      %v2282 = vpop.permute.xlu0 %2281
      %2283 = vrot.lane.b32.xlu0 %v1824, 20
      %v2284 = vpop.permute.xlu0 %2283
      %2285 = vrot.lane.b32.xlu0 %v2222, 20
      %v2286 = vpop.permute.xlu0 %2285
      %2287 = vrot.lane.b32.xlu0 %v2224, 20
      %v2288 = vpop.permute.xlu0 %2287
      %vm2321 = vcmask 195744
      %2322 = vst.msk [vmem:[#allocation2] sm:$0xff] %vm2321, %v2226
      %2323 = vst.msk [vmem:[#allocation2 + $0x8] sm:$0xff] %vm2321, %v2228
      %2324 = vst.msk [vmem:[#allocation2 + $0x10] sm:$0xff] %vm2321, %v2230
      %2325 = vst.msk [vmem:[#allocation2 + $0x18] sm:$0xff] %vm2321, %v2232
      %2326 = vst.msk [vmem:[#allocation2 + $0x20] sm:$0xff] %vm2321, %v2234
      %2327 = vst.msk [vmem:[#allocation2 + $0x28] sm:$0xff] %vm2321, %v2236
      %2328 = vst.msk [vmem:[#allocation2 + $0x30] sm:$0xff] %vm2321, %v2238
      %2329 = vst.msk [vmem:[#allocation2 + $0x38] sm:$0xff] %vm2321, %v2240
      %2330 = vst.msk [vmem:[#allocation2 + $0x40] sm:$0xff] %vm2321, %v2242
      %2331 = vst.msk [vmem:[#allocation2 + $0x48] sm:$0xff] %vm2321, %v2244
      %2332 = vst.msk [vmem:[#allocation2 + $0x50] sm:$0xff] %vm2321, %v2246
      %2333 = vst.msk [vmem:[#allocation2 + $0x58] sm:$0xff] %vm2321, %v2248
      %2334 = vst.msk [vmem:[#allocation2 + $0x60] sm:$0xff] %vm2321, %v2250
      %2335 = vst.msk [vmem:[#allocation2 + $0x68] sm:$0xff] %vm2321, %v2252
      %2336 = vst.msk [vmem:[#allocation2 + $0x70] sm:$0xff] %vm2321, %v2254
      %2337 = vst.msk [vmem:[#allocation2 + $0x78] sm:$0xff] %vm2321, %v2256
      %2338 = vst.msk [vmem:[#allocation2 + $0x80] sm:$0xff] %vm2321, %v2258
      %2339 = vst.msk [vmem:[#allocation2 + $0x88] sm:$0xff] %vm2321, %v2260
      %2340 = vst.msk [vmem:[#allocation2 + $0x90] sm:$0xff] %vm2321, %v2262
      %2341 = vst.msk [vmem:[#allocation2 + $0x98] sm:$0xff] %vm2321, %v2264
      %2342 = vst.msk [vmem:[#allocation2 + $0xa0] sm:$0xff] %vm2321, %v2266
      %2343 = vst.msk [vmem:[#allocation2 + $0xa8] sm:$0xff] %vm2321, %v2268
      %2344 = vst.msk [vmem:[#allocation2 + $0xb0] sm:$0xff] %vm2321, %v2270
      %2345 = vst.msk [vmem:[#allocation2 + $0xb8] sm:$0xff] %vm2321, %v2272
      %2346 = vst.msk [vmem:[#allocation2 + $0xc0] sm:$0xff] %vm2321, %v2274
      %2347 = vst.msk [vmem:[#allocation2 + $0xc8] sm:$0xff] %vm2321, %v2276
      %2348 = vst.msk [vmem:[#allocation2 + $0xd0] sm:$0xff] %vm2321, %v2278
      %2349 = vst.msk [vmem:[#allocation2 + $0xd8] sm:$0xff] %vm2321, %v2280
      %2350 = vst.msk [vmem:[#allocation2 + $0xe0] sm:$0xff] %vm2321, %v2282
      %2351 = vst.msk [vmem:[#allocation2 + $0xe8] sm:$0xff] %vm2321, %v2284
      %2352 = vst.msk [vmem:[#allocation2 + $0xf0] sm:$0xff] %vm2321, %v2286
      %2353 = vst.msk [vmem:[#allocation2 + $0xf8] sm:$0xff] %vm2321, %v2288
      %2356 = vrot.lane.b32.xlu0 %v1405, 24
      %v2357 = vpop.permute.xlu0 %2356
      %2358 = vrot.lane.b32.xlu0 %v1406, 24
      %v2359 = vpop.permute.xlu0 %2358
      %2360 = vrot.lane.b32.xlu0 %v1408, 24
      %v2361 = vpop.permute.xlu0 %2360
      %2362 = vrot.lane.b32.xlu0 %v1409, 24
      %v2363 = vpop.permute.xlu0 %2362
      %2364 = vrot.lane.b32.xlu0 %v1411, 24
      %v2365 = vpop.permute.xlu0 %2364
      %2366 = vrot.lane.b32.xlu0 %v1412, 24
      %v2367 = vpop.permute.xlu0 %2366
      %2368 = vrot.lane.b32.xlu0 %v1414, 24
      %v2369 = vpop.permute.xlu0 %2368
      %2370 = vrot.lane.b32.xlu0 %v1415, 24
      %v2371 = vpop.permute.xlu0 %2370
      %2372 = vrot.lane.b32.xlu0 %v1417, 24
      %v2373 = vpop.permute.xlu0 %2372
      %2374 = vrot.lane.b32.xlu0 %v1418, 24
      %v2375 = vpop.permute.xlu0 %2374
      %2376 = vrot.lane.b32.xlu0 %v1420, 24
      %v2377 = vpop.permute.xlu0 %2376
      %2378 = vrot.lane.b32.xlu0 %v1421, 24
      %v2379 = vpop.permute.xlu0 %2378
      %2380 = vrot.lane.b32.xlu0 %v1423, 24
      %v2381 = vpop.permute.xlu0 %2380
      %2382 = vrot.lane.b32.xlu0 %v1424, 24
      %v2383 = vpop.permute.xlu0 %2382
      %2384 = vrot.lane.b32.xlu0 %v1426, 24
      %v2385 = vpop.permute.xlu0 %2384
      %2386 = vrot.lane.b32.xlu0 %v1427, 24
      %v2387 = vpop.permute.xlu0 %2386
      %2388 = vrot.lane.b32.xlu0 %v1429, 24
      %v2389 = vpop.permute.xlu0 %2388
      %2390 = vrot.lane.b32.xlu0 %v1430, 24
      %v2391 = vpop.permute.xlu0 %2390
      %2392 = vrot.lane.b32.xlu0 %v1432, 24
      %v2393 = vpop.permute.xlu0 %2392
      %2394 = vrot.lane.b32.xlu0 %v1433, 24
      %v2395 = vpop.permute.xlu0 %2394
      %2396 = vrot.lane.b32.xlu0 %v1435, 24
      %v2397 = vpop.permute.xlu0 %2396
      %2398 = vrot.lane.b32.xlu0 %v1436, 24
      %v2399 = vpop.permute.xlu0 %2398
      %2400 = vrot.lane.b32.xlu0 %v1438, 24
      %v2401 = vpop.permute.xlu0 %2400
      %2402 = vrot.lane.b32.xlu0 %v1439, 24
      %v2403 = vpop.permute.xlu0 %2402
      %2404 = vrot.lane.b32.xlu0 %v1441, 24
      %v2405 = vpop.permute.xlu0 %2404
      %2406 = vrot.lane.b32.xlu0 %v1442, 24
      %v2407 = vpop.permute.xlu0 %2406
      %2408 = vrot.lane.b32.xlu0 %v1444, 24
      %v2409 = vpop.permute.xlu0 %2408
      %2410 = vrot.lane.b32.xlu0 %v1445, 24
      %v2411 = vpop.permute.xlu0 %2410
      %2412 = vrot.lane.b32.xlu0 %v1447, 24
      %v2413 = vpop.permute.xlu0 %2412
      %2414 = vrot.lane.b32.xlu0 %v1448, 24
      %v2415 = vpop.permute.xlu0 %2414
      %2416 = vrot.lane.b32.xlu0 %v1450, 24
      %v2417 = vpop.permute.xlu0 %2416
      %2418 = vrot.lane.b32.xlu0 %v1451, 24
      %v2419 = vpop.permute.xlu0 %2418
      %vm2452 = vcmask 228544
      %2453 = vst.msk [vmem:[#allocation2] sm:$0xff] %vm2452, %v2357
      %2454 = vst.msk [vmem:[#allocation2 + $0x8] sm:$0xff] %vm2452, %v2359
      %2455 = vst.msk [vmem:[#allocation2 + $0x10] sm:$0xff] %vm2452, %v2361
      %2456 = vst.msk [vmem:[#allocation2 + $0x18] sm:$0xff] %vm2452, %v2363
      %2457 = vst.msk [vmem:[#allocation2 + $0x20] sm:$0xff] %vm2452, %v2365
      %2458 = vst.msk [vmem:[#allocation2 + $0x28] sm:$0xff] %vm2452, %v2367
      %2459 = vst.msk [vmem:[#allocation2 + $0x30] sm:$0xff] %vm2452, %v2369
      %2460 = vst.msk [vmem:[#allocation2 + $0x38] sm:$0xff] %vm2452, %v2371
      %2461 = vst.msk [vmem:[#allocation2 + $0x40] sm:$0xff] %vm2452, %v2373
      %2462 = vst.msk [vmem:[#allocation2 + $0x48] sm:$0xff] %vm2452, %v2375
      %2463 = vst.msk [vmem:[#allocation2 + $0x50] sm:$0xff] %vm2452, %v2377
      %2464 = vst.msk [vmem:[#allocation2 + $0x58] sm:$0xff] %vm2452, %v2379
      %2465 = vst.msk [vmem:[#allocation2 + $0x60] sm:$0xff] %vm2452, %v2381
      %2466 = vst.msk [vmem:[#allocation2 + $0x68] sm:$0xff] %vm2452, %v2383
      %2467 = vst.msk [vmem:[#allocation2 + $0x70] sm:$0xff] %vm2452, %v2385
      %2468 = vst.msk [vmem:[#allocation2 + $0x78] sm:$0xff] %vm2452, %v2387
      %2469 = vst.msk [vmem:[#allocation2 + $0x80] sm:$0xff] %vm2452, %v2389
      %2470 = vst.msk [vmem:[#allocation2 + $0x88] sm:$0xff] %vm2452, %v2391
      %2471 = vst.msk [vmem:[#allocation2 + $0x90] sm:$0xff] %vm2452, %v2393
      %2472 = vst.msk [vmem:[#allocation2 + $0x98] sm:$0xff] %vm2452, %v2395
      %2473 = vst.msk [vmem:[#allocation2 + $0xa0] sm:$0xff] %vm2452, %v2397
      %2474 = vst.msk [vmem:[#allocation2 + $0xa8] sm:$0xff] %vm2452, %v2399
      %2475 = vst.msk [vmem:[#allocation2 + $0xb0] sm:$0xff] %vm2452, %v2401
      %2476 = vst.msk [vmem:[#allocation2 + $0xb8] sm:$0xff] %vm2452, %v2403
      %2477 = vst.msk [vmem:[#allocation2 + $0xc0] sm:$0xff] %vm2452, %v2405
      %2478 = vst.msk [vmem:[#allocation2 + $0xc8] sm:$0xff] %vm2452, %v2407
      %2479 = vst.msk [vmem:[#allocation2 + $0xd0] sm:$0xff] %vm2452, %v2409
      %2480 = vst.msk [vmem:[#allocation2 + $0xd8] sm:$0xff] %vm2452, %v2411
      %2481 = vst.msk [vmem:[#allocation2 + $0xe0] sm:$0xff] %vm2452, %v2413
      %2482 = vst.msk [vmem:[#allocation2 + $0xe8] sm:$0xff] %vm2452, %v2415
      %2483 = vst.msk [vmem:[#allocation2 + $0xf0] sm:$0xff] %vm2452, %v2417
      %2484 = vst.msk [vmem:[#allocation2 + $0xf8] sm:$0xff] %vm2452, %v2419
      %v2486 = vrot.slane %v1450, 1
      %v2487 = vrot.slane %v1451, 1
      %v2488 = vsel %vm1534, %v2486, %v2487
      %v2489 = vrot.slane %v1452, 1
      %v2490 = vsel %vm1534, %v2487, %v2489
      %2491 = vrot.lane.b32.xlu0 %v1547, 28
      %v2492 = vpop.permute.xlu0 %2491
      %2493 = vrot.lane.b32.xlu0 %v1549, 28
      %v2494 = vpop.permute.xlu0 %2493
      %2495 = vrot.lane.b32.xlu0 %v1552, 28
      %v2496 = vpop.permute.xlu0 %2495
      %2497 = vrot.lane.b32.xlu0 %v1554, 28
      %v2498 = vpop.permute.xlu0 %2497
      %2499 = vrot.lane.b32.xlu0 %v1557, 28
      %v2500 = vpop.permute.xlu0 %2499
      %2501 = vrot.lane.b32.xlu0 %v1559, 28
      %v2502 = vpop.permute.xlu0 %2501
      %2503 = vrot.lane.b32.xlu0 %v1562, 28
      %v2504 = vpop.permute.xlu0 %2503
      %2505 = vrot.lane.b32.xlu0 %v1564, 28
      %v2506 = vpop.permute.xlu0 %2505
      %2507 = vrot.lane.b32.xlu0 %v1567, 28
      %v2508 = vpop.permute.xlu0 %2507
      %2509 = vrot.lane.b32.xlu0 %v1569, 28
      %v2510 = vpop.permute.xlu0 %2509
      %2511 = vrot.lane.b32.xlu0 %v1572, 28
      %v2512 = vpop.permute.xlu0 %2511
      %2513 = vrot.lane.b32.xlu0 %v1574, 28
      %v2514 = vpop.permute.xlu0 %2513
      %2515 = vrot.lane.b32.xlu0 %v1577, 28
      %v2516 = vpop.permute.xlu0 %2515
      %2517 = vrot.lane.b32.xlu0 %v1579, 28
      %v2518 = vpop.permute.xlu0 %2517
      %2519 = vrot.lane.b32.xlu0 %v1582, 28
      %v2520 = vpop.permute.xlu0 %2519
      %2521 = vrot.lane.b32.xlu0 %v1584, 28
      %v2522 = vpop.permute.xlu0 %2521
      %2523 = vrot.lane.b32.xlu0 %v1587, 28
      %v2524 = vpop.permute.xlu0 %2523
      %2525 = vrot.lane.b32.xlu0 %v1589, 28
      %v2526 = vpop.permute.xlu0 %2525
      %2527 = vrot.lane.b32.xlu0 %v1592, 28
      %v2528 = vpop.permute.xlu0 %2527
      %2529 = vrot.lane.b32.xlu0 %v1594, 28
      %v2530 = vpop.permute.xlu0 %2529
      %2531 = vrot.lane.b32.xlu0 %v1597, 28
      %v2532 = vpop.permute.xlu0 %2531
      %2533 = vrot.lane.b32.xlu0 %v1599, 28
      %v2534 = vpop.permute.xlu0 %2533
      %2535 = vrot.lane.b32.xlu0 %v1602, 28
      %v2536 = vpop.permute.xlu0 %2535
      %2537 = vrot.lane.b32.xlu0 %v1604, 28
      %v2538 = vpop.permute.xlu0 %2537
      %2539 = vrot.lane.b32.xlu0 %v1607, 28
      %v2540 = vpop.permute.xlu0 %2539
      %2541 = vrot.lane.b32.xlu0 %v1609, 28
      %v2542 = vpop.permute.xlu0 %2541
      %2543 = vrot.lane.b32.xlu0 %v1612, 28
      %v2544 = vpop.permute.xlu0 %2543
      %2545 = vrot.lane.b32.xlu0 %v1614, 28
      %v2546 = vpop.permute.xlu0 %2545
      %2547 = vrot.lane.b32.xlu0 %v2088, 28
      %v2548 = vpop.permute.xlu0 %2547
      %2549 = vrot.lane.b32.xlu0 %v2090, 28
      %v2550 = vpop.permute.xlu0 %2549
      %2551 = vrot.lane.b32.xlu0 %v2488, 28
      %v2552 = vpop.permute.xlu0 %2551
      %2553 = vrot.lane.b32.xlu0 %v2490, 28
      %v2554 = vpop.permute.xlu0 %2553
      %vm2587 = vcmask 261344
      %2588 = vst.msk [vmem:[#allocation2] sm:$0xff] %vm2587, %v2492
      %2589 = vst.msk [vmem:[#allocation2 + $0x8] sm:$0xff] %vm2587, %v2494
      %2590 = vst.msk [vmem:[#allocation2 + $0x10] sm:$0xff] %vm2587, %v2496
      %2591 = vst.msk [vmem:[#allocation2 + $0x18] sm:$0xff] %vm2587, %v2498
      %2592 = vst.msk [vmem:[#allocation2 + $0x20] sm:$0xff] %vm2587, %v2500
      %2593 = vst.msk [vmem:[#allocation2 + $0x28] sm:$0xff] %vm2587, %v2502
      %2594 = vst.msk [vmem:[#allocation2 + $0x30] sm:$0xff] %vm2587, %v2504
      %2595 = vst.msk [vmem:[#allocation2 + $0x38] sm:$0xff] %vm2587, %v2506
      %2596 = vst.msk [vmem:[#allocation2 + $0x40] sm:$0xff] %vm2587, %v2508
      %2597 = vst.msk [vmem:[#allocation2 + $0x48] sm:$0xff] %vm2587, %v2510
      %2598 = vst.msk [vmem:[#allocation2 + $0x50] sm:$0xff] %vm2587, %v2512
      %2599 = vst.msk [vmem:[#allocation2 + $0x58] sm:$0xff] %vm2587, %v2514
      %2600 = vst.msk [vmem:[#allocation2 + $0x60] sm:$0xff] %vm2587, %v2516
      %2601 = vst.msk [vmem:[#allocation2 + $0x68] sm:$0xff] %vm2587, %v2518
      %2602 = vst.msk [vmem:[#allocation2 + $0x70] sm:$0xff] %vm2587, %v2520
      %2603 = vst.msk [vmem:[#allocation2 + $0x78] sm:$0xff] %vm2587, %v2522
      %2604 = vst.msk [vmem:[#allocation2 + $0x80] sm:$0xff] %vm2587, %v2524
      %2605 = vst.msk [vmem:[#allocation2 + $0x88] sm:$0xff] %vm2587, %v2526
      %2606 = vst.msk [vmem:[#allocation2 + $0x90] sm:$0xff] %vm2587, %v2528
      %2607 = vst.msk [vmem:[#allocation2 + $0x98] sm:$0xff] %vm2587, %v2530
      %2608 = vst.msk [vmem:[#allocation2 + $0xa0] sm:$0xff] %vm2587, %v2532
      %2609 = vst.msk [vmem:[#allocation2 + $0xa8] sm:$0xff] %vm2587, %v2534
      %2610 = vst.msk [vmem:[#allocation2 + $0xb0] sm:$0xff] %vm2587, %v2536
      %2611 = vst.msk [vmem:[#allocation2 + $0xb8] sm:$0xff] %vm2587, %v2538
      %2612 = vst.msk [vmem:[#allocation2 + $0xc0] sm:$0xff] %vm2587, %v2540
      %2613 = vst.msk [vmem:[#allocation2 + $0xc8] sm:$0xff] %vm2587, %v2542
      %2614 = vst.msk [vmem:[#allocation2 + $0xd0] sm:$0xff] %vm2587, %v2544
      %2615 = vst.msk [vmem:[#allocation2 + $0xd8] sm:$0xff] %vm2587, %v2546
      %2616 = vst.msk [vmem:[#allocation2 + $0xe0] sm:$0xff] %vm2587, %v2548
      %2617 = vst.msk [vmem:[#allocation2 + $0xe8] sm:$0xff] %vm2587, %v2550
      %2618 = vst.msk [vmem:[#allocation2 + $0xf0] sm:$0xff] %vm2587, %v2552
      %2619 = vst.msk [vmem:[#allocation2 + $0xf8] sm:$0xff] %vm2587, %v2554
      %v2620 = vrot.slane %v1450, 2
      %v2621 = vrot.slane %v1451, 2
      %v2622 = vsel %vm1744, %v2620, %v2621
      %v2623 = vrot.slane %v1452, 2
      %v2624 = vsel %vm1744, %v2621, %v2623
      %2625 = vrot.lane.b32.xlu0 %v1757, 32
      %v2626 = vpop.permute.xlu0 %2625
      %2627 = vrot.lane.b32.xlu0 %v1759, 32
      %v2628 = vpop.permute.xlu0 %2627
      %2629 = vrot.lane.b32.xlu0 %v1762, 32
      %v2630 = vpop.permute.xlu0 %2629
      %2631 = vrot.lane.b32.xlu0 %v1764, 32
      %v2632 = vpop.permute.xlu0 %2631
      %2633 = vrot.lane.b32.xlu0 %v1767, 32
      %v2634 = vpop.permute.xlu0 %2633
      %2635 = vrot.lane.b32.xlu0 %v1769, 32
      %v2636 = vpop.permute.xlu0 %2635
      %2637 = vrot.lane.b32.xlu0 %v1772, 32
      %v2638 = vpop.permute.xlu0 %2637
      %2639 = vrot.lane.b32.xlu0 %v1774, 32
      %v2640 = vpop.permute.xlu0 %2639
      %2641 = vrot.lane.b32.xlu0 %v1777, 32
      %v2642 = vpop.permute.xlu0 %2641
      %2643 = vrot.lane.b32.xlu0 %v1779, 32
      %v2644 = vpop.permute.xlu0 %2643
      %2645 = vrot.lane.b32.xlu0 %v1782, 32
      %v2646 = vpop.permute.xlu0 %2645
      %2647 = vrot.lane.b32.xlu0 %v1784, 32
      %v2648 = vpop.permute.xlu0 %2647
      %2649 = vrot.lane.b32.xlu0 %v1787, 32
      %v2650 = vpop.permute.xlu0 %2649
      %2651 = vrot.lane.b32.xlu0 %v1789, 32
      %v2652 = vpop.permute.xlu0 %2651
      %2653 = vrot.lane.b32.xlu0 %v1792, 32
      %v2654 = vpop.permute.xlu0 %2653
      %2655 = vrot.lane.b32.xlu0 %v1794, 32
      %v2656 = vpop.permute.xlu0 %2655
      %2657 = vrot.lane.b32.xlu0 %v1797, 32
      %v2658 = vpop.permute.xlu0 %2657
      %2659 = vrot.lane.b32.xlu0 %v1799, 32
      %v2660 = vpop.permute.xlu0 %2659
      %2661 = vrot.lane.b32.xlu0 %v1802, 32
      %v2662 = vpop.permute.xlu0 %2661
      %2663 = vrot.lane.b32.xlu0 %v1804, 32
      %v2664 = vpop.permute.xlu0 %2663
      %2665 = vrot.lane.b32.xlu0 %v1807, 32
      %v2666 = vpop.permute.xlu0 %2665
      %2667 = vrot.lane.b32.xlu0 %v1809, 32
      %v2668 = vpop.permute.xlu0 %2667
      %2669 = vrot.lane.b32.xlu0 %v1812, 32
      %v2670 = vpop.permute.xlu0 %2669
      %2671 = vrot.lane.b32.xlu0 %v1814, 32
      %v2672 = vpop.permute.xlu0 %2671
      %2673 = vrot.lane.b32.xlu0 %v1817, 32
      %v2674 = vpop.permute.xlu0 %2673
      %2675 = vrot.lane.b32.xlu0 %v1819, 32
      %v2676 = vpop.permute.xlu0 %2675
      %2677 = vrot.lane.b32.xlu0 %v1822, 32
      %v2678 = vpop.permute.xlu0 %2677
      %2679 = vrot.lane.b32.xlu0 %v1824, 32
      %v2680 = vpop.permute.xlu0 %2679
      %2681 = vrot.lane.b32.xlu0 %v2222, 32
      %v2682 = vpop.permute.xlu0 %2681
      %2683 = vrot.lane.b32.xlu0 %v2224, 32
      %v2684 = vpop.permute.xlu0 %2683
      %2685 = vrot.lane.b32.xlu0 %v2622, 32
      %v2686 = vpop.permute.xlu0 %2685
      %2687 = vrot.lane.b32.xlu0 %v2624, 32
      %v2688 = vpop.permute.xlu0 %2687
      %vm2721 = vcmask 294144
      %2722 = vst.msk [vmem:[#allocation2] sm:$0xff] %vm2721, %v2626
      %2723 = vst.msk [vmem:[#allocation2 + $0x8] sm:$0xff] %vm2721, %v2628
      %2724 = vst.msk [vmem:[#allocation2 + $0x10] sm:$0xff] %vm2721, %v2630
      %2725 = vst.msk [vmem:[#allocation2 + $0x18] sm:$0xff] %vm2721, %v2632
      %2726 = vst.msk [vmem:[#allocation2 + $0x20] sm:$0xff] %vm2721, %v2634
      %2727 = vst.msk [vmem:[#allocation2 + $0x28] sm:$0xff] %vm2721, %v2636
      %2728 = vst.msk [vmem:[#allocation2 + $0x30] sm:$0xff] %vm2721, %v2638
      %2729 = vst.msk [vmem:[#allocation2 + $0x38] sm:$0xff] %vm2721, %v2640
      %2730 = vst.msk [vmem:[#allocation2 + $0x40] sm:$0xff] %vm2721, %v2642
      %2731 = vst.msk [vmem:[#allocation2 + $0x48] sm:$0xff] %vm2721, %v2644
      %2732 = vst.msk [vmem:[#allocation2 + $0x50] sm:$0xff] %vm2721, %v2646
      %2733 = vst.msk [vmem:[#allocation2 + $0x58] sm:$0xff] %vm2721, %v2648
      %2734 = vst.msk [vmem:[#allocation2 + $0x60] sm:$0xff] %vm2721, %v2650
      %2735 = vst.msk [vmem:[#allocation2 + $0x68] sm:$0xff] %vm2721, %v2652
      %2736 = vst.msk [vmem:[#allocation2 + $0x70] sm:$0xff] %vm2721, %v2654
      %2737 = vst.msk [vmem:[#allocation2 + $0x78] sm:$0xff] %vm2721, %v2656
      %2738 = vst.msk [vmem:[#allocation2 + $0x80] sm:$0xff] %vm2721, %v2658
      %2739 = vst.msk [vmem:[#allocation2 + $0x88] sm:$0xff] %vm2721, %v2660
      %2740 = vst.msk [vmem:[#allocation2 + $0x90] sm:$0xff] %vm2721, %v2662
      %2741 = vst.msk [vmem:[#allocation2 + $0x98] sm:$0xff] %vm2721, %v2664
      %2742 = vst.msk [vmem:[#allocation2 + $0xa0] sm:$0xff] %vm2721, %v2666
      %2743 = vst.msk [vmem:[#allocation2 + $0xa8] sm:$0xff] %vm2721, %v2668
      %2744 = vst.msk [vmem:[#allocation2 + $0xb0] sm:$0xff] %vm2721, %v2670
      %2745 = vst.msk [vmem:[#allocation2 + $0xb8] sm:$0xff] %vm2721, %v2672
      %2746 = vst.msk [vmem:[#allocation2 + $0xc0] sm:$0xff] %vm2721, %v2674
      %2747 = vst.msk [vmem:[#allocation2 + $0xc8] sm:$0xff] %vm2721, %v2676
      %2748 = vst.msk [vmem:[#allocation2 + $0xd0] sm:$0xff] %vm2721, %v2678
      %2749 = vst.msk [vmem:[#allocation2 + $0xd8] sm:$0xff] %vm2721, %v2680
      %2750 = vst.msk [vmem:[#allocation2 + $0xe0] sm:$0xff] %vm2721, %v2682
      %2751 = vst.msk [vmem:[#allocation2 + $0xe8] sm:$0xff] %vm2721, %v2684
      %2752 = vst.msk [vmem:[#allocation2 + $0xf0] sm:$0xff] %vm2721, %v2686
      %2753 = vst.msk [vmem:[#allocation2 + $0xf8] sm:$0xff] %vm2721, %v2688
      %v2754 = vld [vmem:[#allocation2] sm:$0xff]
      %v2755 = vld [vmem:[#allocation2 + $0x8] sm:$0xff]
      %v2756 = vld [vmem:[#allocation2 + $0x10] sm:$0xff]
      %v2757 = vld [vmem:[#allocation2 + $0x18] sm:$0xff]
      %v2758 = vld [vmem:[#allocation2 + $0x20] sm:$0xff]
      %v2759 = vld [vmem:[#allocation2 + $0x28] sm:$0xff]
      %v2760 = vld [vmem:[#allocation2 + $0x30] sm:$0xff]
      %v2761 = vld [vmem:[#allocation2 + $0x38] sm:$0xff]
      %v2762 = vld [vmem:[#allocation2 + $0x40] sm:$0xff]
      %v2763 = vld [vmem:[#allocation2 + $0x48] sm:$0xff]
      %v2764 = vld [vmem:[#allocation2 + $0x50] sm:$0xff]
      %v2765 = vld [vmem:[#allocation2 + $0x58] sm:$0xff]
      %v2766 = vld [vmem:[#allocation2 + $0x60] sm:$0xff]
      %v2767 = vld [vmem:[#allocation2 + $0x68] sm:$0xff]
      %v2768 = vld [vmem:[#allocation2 + $0x70] sm:$0xff]
      %v2769 = vld [vmem:[#allocation2 + $0x78] sm:$0xff]
      %v2770 = vld [vmem:[#allocation2 + $0x80] sm:$0xff]
      %v2771 = vld [vmem:[#allocation2 + $0x88] sm:$0xff]
      %v2772 = vld [vmem:[#allocation2 + $0x90] sm:$0xff]
      %v2773 = vld [vmem:[#allocation2 + $0x98] sm:$0xff]
      %v2774 = vld [vmem:[#allocation2 + $0xa0] sm:$0xff]
      %v2775 = vld [vmem:[#allocation2 + $0xa8] sm:$0xff]
      %v2776 = vld [vmem:[#allocation2 + $0xb0] sm:$0xff]
      %v2777 = vld [vmem:[#allocation2 + $0xb8] sm:$0xff]
      %v2778 = vld [vmem:[#allocation2 + $0xc0] sm:$0xff]
      %v2779 = vld [vmem:[#allocation2 + $0xc8] sm:$0xff]
      %v2780 = vld [vmem:[#allocation2 + $0xd0] sm:$0xff]
      %v2781 = vld [vmem:[#allocation2 + $0xd8] sm:$0xff]
      %v2782 = vld [vmem:[#allocation2 + $0xe0] sm:$0xff]
      %v2783 = vld [vmem:[#allocation2 + $0xe8] sm:$0xff]
      %v2784 = vld [vmem:[#allocation2 + $0xf0] sm:$0xff]
      %v2785 = vld [vmem:[#allocation2 + $0xf8] sm:$0xff]
      %v2786 = vpack.c.bf16 %v2755, %v2754
      %v2787 = vpack.c.bf16 %v2757, %v2756
      %v2788 = vpack.c.bf16 %v2759, %v2758
      %v2789 = vpack.c.bf16 %v2761, %v2760
      %v2790 = vpack.c.bf16 %v2763, %v2762
      %v2791 = vpack.c.bf16 %v2765, %v2764
      %v2792 = vpack.c.bf16 %v2767, %v2766
      %v2793 = vpack.c.bf16 %v2769, %v2768
      %v2794 = vpack.c.bf16 %v2771, %v2770
      %v2795 = vpack.c.bf16 %v2773, %v2772
      %v2796 = vpack.c.bf16 %v2775, %v2774
      %v2797 = vpack.c.bf16 %v2777, %v2776
      %v2798 = vpack.c.bf16 %v2779, %v2778
      %v2799 = vpack.c.bf16 %v2781, %v2780
      %v2800 = vpack.c.bf16 %v2783, %v2782
      %v2801 = vpack.c.bf16 %v2785, %v2784
      %2803 = vset.pattern.permute.xlu0 0
      %2804 = vperm.xlu0 %2803, %v1344
      %v2805 = vpop.permute.xlu0 %2804
      %vm2807 = vcmask 293888
      %v2809 = vsel %vm2807, %v1343, 0
      %v2812 = vsel %vm2807, %v2786, 0
      %v2815 = vsel %vm2807, %v2787, 0
      %v2818 = vsel %vm2807, %v2788, 0
      %v2821 = vsel %vm2807, %v2789, 0
      %v2824 = vsel %vm2807, %v2790, 0
      %v2827 = vsel %vm2807, %v2791, 0
      %v2830 = vsel %vm2807, %v2792, 0
      %v2833 = vsel %vm2807, %v2793, 0
      %v2836 = vsel %vm2807, %v2794, 0
      %v2839 = vsel %vm2807, %v2795, 0
      %v2842 = vsel %vm2807, %v2796, 0
      %v2845 = vsel %vm2807, %v2797, 0
      %v2848 = vsel %vm2807, %v2798, 0
      %v2851 = vsel %vm2807, %v2799, 0
      %v2854 = vsel %vm2807, %v2800, 0
      %v2857 = vsel %vm2807, %v2801, 0
      %2859 = vmatprep.subr.bf16.mxu0 0
      %2860 = vmatpush1.bf16.xpose.msra.mxu0 %v2812
      %2861 = vmatprep.subr.bf16.mxu0 0
      %2862 = vmatpush1.bf16.xpose.msra.mxu0 %v2815
      %2863 = vmatprep.subr.bf16.mxu0 0
      %2864 = vmatpush1.bf16.xpose.msra.mxu0 %v2818
      %2865 = vmatprep.subr.bf16.mxu0 0
      %2866 = vmatpush1.bf16.xpose.msra.mxu0 %v2821
      %2867 = vmatprep.subr.bf16.mxu0 0
      %2868 = vmatpush1.bf16.xpose.msra.mxu0 %v2824
      %2869 = vmatprep.subr.bf16.mxu0 0
      %2870 = vmatpush1.bf16.xpose.msra.mxu0 %v2827
      %2871 = vmatprep.subr.bf16.mxu0 0
      %2872 = vmatpush1.bf16.xpose.msra.mxu0 %v2830
      %2873 = vmatprep.subr.bf16.mxu0 0
      %2874 = vmatpush1.bf16.xpose.msra.mxu0 %v2833
      %2875 = vmatprep.subr.bf16.mxu0 0
      %2876 = vmatpush1.bf16.xpose.msra.mxu0 %v2836
      %2877 = vmatprep.subr.bf16.mxu0 0
      %2878 = vmatpush1.bf16.xpose.msra.mxu0 %v2839
      %2879 = vmatprep.subr.bf16.mxu0 0
      %2880 = vmatpush1.bf16.xpose.msra.mxu0 %v2842
      %2881 = vmatprep.subr.bf16.mxu0 0
      %2882 = vmatpush1.bf16.xpose.msra.mxu0 %v2845
      %2883 = vmatprep.subr.bf16.mxu0 0
      %2884 = vmatpush1.bf16.xpose.msra.mxu0 %v2848
      %2885 = vmatprep.subr.bf16.mxu0 0
      %2886 = vmatpush1.bf16.xpose.msra.mxu0 %v2851
      %2887 = vmatprep.subr.bf16.mxu0 0
      %2888 = vmatpush1.bf16.xpose.msra.mxu0 %v2854
      %2889 = vmatprep.subr.bf16.mxu0 0
      %2890 = vmatpush1.bf16.xpose.msra.mxu0 %v2857
      %2891 = vmatprep.mubr.bf16.mxu0 0
      %2892 = vmatmul.mubr.bf16.gmra.mrb[0].mxu0 %v2809
      %v2893 = vpop.f32.mrb[0].mxu0
      %v2894 = vadd.f32 %v2805, %v2893
      %v2895 = vpop.f32.mrb[0].mxu0
      %v2896 = vadd.f32 %v2805, %v2895
      %v2897 = vpop.f32.mrb[0].mxu0
      %v2898 = vpop.f32.mrb[0].mxu0
      %2899 = vdwg.mxu0
      %vm2900 = vcmp.gt.f32.partialorder %v2894, 0.0
      %vm2901 = vcmp.gt.f32.partialorder %v2896, 0.0
      %2902 = vset.pattern.permute.xlu0 1
      %2903 = vperm.xlu0 %2902, %v1344
      %v2904 = vpop.permute.xlu0 %2903
      %v2906 = vmul.f32 %v2904, %v2894
      %v2907 = vmul.f32 %v2904, %v2896
      %v2908 = vsel %vm2900, %v2894, %v2906
      %v2909 = vsel %vm2901, %v2896, %v2907
      %2910 = vst [vmem:[%s179] sm:$0xff] %v2908
      %2911 = vst [vmem:[%s179 + $0x8] sm:$0xff] %v2909
      %p2912 = scmp.lt.s32.totalorder %s20, 1
      %s2913 = scalar_select %p2912, %s20, 1
      %s2914 = smul.addr %s2913, 2
      %s2915 = smul.addr %s2914, 8
      %s2916 = scalar_lea.vmem %s4, %s2915
      // Predicated region
      $region33: #{basic_block_forward.2} parent=31 // pred_check
        %p2917 = pneg %p106
      $region34: #{basic_block_forward.2} parent=31 // pred_check_branch
        %2919 = sbr.rel (%p2917) target = $region36
      $region35: #{basic_block_forward.2} parent=31 // pred_region
        _
      $region36: #{basic_block_forward.2} parent=31 // pred_fallthru
        _
    $region32: #{basic_block_forward.2} parent=5 // pred_fallthru
      _
    %p2920 = scmp.le.s32.totalorder 2, %s15
    // Predicated region
    $region37: #{basic_block_forward.2} parent=5 // pred_check
      %p2921 = pneg %p2920
    $region38: #{basic_block_forward.2} parent=5 // pred_check_branch
      %2923 = sbr.rel (%p2921) target = $region40
    $region39: #{basic_block_forward.2} parent=5 // pred_region
      %s2924 = ssub.s32 %s15, 2
      // Predicated region
      $region41: #{basic_block_forward.2} parent=39 // pred_check
        %p2925 = pneg %p112
      $region42: #{basic_block_forward.2} parent=39 // pred_check_branch
        %2927 = sbr.rel (%p2925) target = $region44
      $region43: #{basic_block_forward.2} parent=39 // pred_region
        %p2928 = scmp.lt.s32.totalorder %s21, 1
        %s2929 = scalar_select %p2928, %s21, 1
        %s2930 = smul.addr %s2929, 2
        %s2931 = smul.addr %s2930, 8
        %s2932 = scalar_lea.vmem %s4, %s2931
      $region44: #{basic_block_forward.2} parent=39 // pred_fallthru
        _
    $region40: #{basic_block_forward.2} parent=5 // pred_fallthru
      _
  $region6: #{basic_block_forward.2} parent=0 // loop_footer
    %s19 = sadd.s32 1, %s15
  $region7: #{basic_block_forward.2} parent=0 // loop_footer_branch
    %14 = sbr.rel target = $region3
  $region8: #{basic_block_forward.2} parent=0 // loop_exit
    _

</llo_original>
